<compile_context>
chip_gen: v6e
topology: v6e:2x2x1
jax: 0.10.0
libtpu: 0.0.40
codegen_flags: <defaults>
</compile_context>

<pallas_src>
import functools

import jax
import jax.numpy as jnp
import numpy as np
from jax.experimental import pallas as pl
from jax.experimental.pallas import tpu as pltpu


def _layer_norm(x, gamma, beta, eps=1e-6):
    mu = jnp.mean(x, axis=-1, keepdims=True)
    var = jnp.mean((x - mu) ** 2, axis=-1, keepdims=True)
    return (x - mu) * jax.lax.rsqrt(var + eps) * gamma + beta


# Rows of the packed (6, D) per-feature parameter slab.
_BO, _G1, _BE1, _BF2, _G2, _BE2 = range(6)


def encoder_layer_kernel(
    x_ref,        # (TB*S, D) f32, pipelined over batch blocks
    wqkv_ref,     # (D, 3D)   bf16, VMEM-resident (grid-invariant); q cols pre-scaled
    bqkv_ref,     # (1, 3D)   f32  (bq pre-scaled by 1/sqrt(dk))
    wo_ref,       # (D, D)    bf16
    w1_ref,       # (D, H)    bf16
    bf1_ref,      # (1, H)    f32
    w2_ref,       # (H, D)    bf16
    vecs_ref,     # (6, D)    f32: [bo, ln1_g, ln1_b, ffn_b2, ln2_g, ln2_b]
    o_ref,        # (TB*S, D) f32
    ctx_ref,      # (TB*S, D) f32 VMEM scratch: per-head context lands here
    *, num_heads, seq_len,
):
    x = x_ref[...]                                  # (R, D) f32, R = TB*S
    R, D = x.shape
    TB = R // seq_len
    dk = D // num_heads

    # ---- fused QKV projection (bf16 operands, f32 MXU accumulation) -------
    # 1/sqrt(dk) is already folded into the q columns of wqkv/bqkv host-side.
    qkv = jnp.dot(x.astype(jnp.bfloat16), wqkv_ref[...],
                  preferred_element_type=jnp.float32) + bqkv_ref[0]
    qkv_b = qkv.astype(jnp.bfloat16)                # single cast; heads sliced below

    # ---- multi-head self-attention: per (batch-row, head) 2-D MXU matmuls --
    # Each head's context is stored at its static lane offset in the VMEM
    # scratch; no per-head concatenation, no separate q/k/v materialization.
    for b in range(TB):          # static unroll: TB is a small compile-time const
        rows = slice(b * seq_len, (b + 1) * seq_len)
        for h in range(num_heads):                  # static unroll, small head count
            qs = slice(h * dk, (h + 1) * dk)
            ks = slice(D + h * dk, D + (h + 1) * dk)
            vs = slice(2 * D + h * dk, 2 * D + (h + 1) * dk)
            s_h = jnp.dot(qkv_b[rows, qs], qkv_b[rows, ks].T,
                          preferred_element_type=jnp.float32)        # (S, S) f32
            # softmax in f32 (mask=None path)
            s_h = s_h - jnp.max(s_h, axis=-1, keepdims=True)
            p_h = jnp.exp(s_h)
            p_h = p_h * pl.reciprocal(jnp.sum(p_h, axis=-1, keepdims=True),
                                      approx=True)
            ctx_ref[rows, qs] = jnp.dot(p_h.astype(jnp.bfloat16), qkv_b[rows, vs],
                                        preferred_element_type=jnp.float32)

    ctx = ctx_ref[...]                              # (R, D) f32

    attn_out = jnp.dot(ctx.astype(jnp.bfloat16), wo_ref[...],
                       preferred_element_type=jnp.float32) + vecs_ref[_BO]

    # residual + LayerNorm1 (f32)
    x1 = _layer_norm(x + attn_out, vecs_ref[_G1], vecs_ref[_BE1])

    # ---- position-wise feed-forward ----------------------------------------
    hmid = jnp.dot(x1.astype(jnp.bfloat16), w1_ref[...],
                   preferred_element_type=jnp.float32) + bf1_ref[0]
    hmid = jnp.maximum(hmid, 0.0)                                    # ReLU
    ff = jnp.dot(hmid.astype(jnp.bfloat16), w2_ref[...],
                 preferred_element_type=jnp.float32) + vecs_ref[_BF2]

    # residual + LayerNorm2 (f32)
    o_ref[...] = _layer_norm(x1 + ff, vecs_ref[_G2], vecs_ref[_BE2]).astype(o_ref.dtype)


def _pick_block_b(B):
    """Batch rows per grid step: amortize per-step overhead while keeping
    at least 2 grid steps (v7x megacore) and dividing B exactly."""
    if B <= 1:
        return 1
    tb = min(8, B // 2)
    while tb > 1 and B % tb != 0:
        tb -= 1
    return max(tb, 1)


def _vmem_limit_bytes():
    """Derive the scoped-VMEM budget from the chip instead of hard-coding."""
    try:
        cap = pltpu.get_tpu_info().vmem_capacity_bytes
    except Exception:  # conservative fallback if the query is unavailable
        cap = 64 * 1024 * 1024
    return int(min(cap * 3 // 4, 100 * 1024 * 1024))


def encoder_layer(x, params, *, num_heads, block_b=None):
    B, S, D = x.shape
    H = params['w1'].shape[1]
    dk = D // num_heads
    inv_sqrt_dk = jnp.float32(1.0 / np.sqrt(dk))

    if block_b is None:
        block_b = _pick_block_b(B)
    assert B % block_b == 0
    nb = B // block_b
    rows_per_block = block_b * S

    # Host-side packing: fold 1/sqrt(dk) into the q projection (in f32), fuse
    # QKV weights, cast matmul weights to bf16 (halves DMA bytes + VMEM), and
    # pack the 6 remaining (1, D) vectors into one slab (8 kernel operands).
    wqkv = jnp.concatenate([params['wq'] * inv_sqrt_dk, params['wk'], params['wv']],
                           axis=1).astype(jnp.bfloat16)              # (D, 3D)
    bqkv = jnp.concatenate([params['bq'] * inv_sqrt_dk, params['bk'], params['bv']],
                           axis=1)                                    # (1, 3D) f32
    wo = params['wo'].astype(jnp.bfloat16)                            # (D, D)
    w1 = params['w1'].astype(jnp.bfloat16)                            # (D, H)
    bf1 = params['bf1']                                               # (1, H) f32
    w2 = params['w2'].astype(jnp.bfloat16)                            # (H, D)
    vecs = jnp.concatenate([params['bo'], params['g1'], params['be1'],
                            params['bf2'], params['g2'], params['be2']],
                           axis=0)                                    # (6, D) f32

    # Present x / out as flat (B*S, D) row slabs so a grid step is one
    # contiguous (TB*S, D) block (free reshape outside the kernel).
    x2d = x.reshape(B * S, D)

    # Grid-invariant parameters: one resident VMEM copy, no per-step DMA,
    # no double buffering.
    vmem = pl.BlockSpec(memory_space=pltpu.MemorySpace.VMEM)

    in_specs = [
        pl.BlockSpec((rows_per_block, D), lambda i: (i, 0)),   # x: batch-blocked
        vmem,   # wqkv
        vmem,   # bqkv
        vmem,   # wo
        vmem,   # w1
        vmem,   # bf1
        vmem,   # w2
        vmem,   # vecs (bo, ln1 g/b, ffn b2, ln2 g/b)
    ]

    kernel = functools.partial(encoder_layer_kernel,
                               num_heads=num_heads, seq_len=S)

    out2d = pl.pallas_call(
        kernel,
        out_shape=jax.ShapeDtypeStruct((B * S, D), jnp.float32),
        grid_spec=pltpu.PrefetchScalarGridSpec(
            num_scalar_prefetch=0,
            grid=(nb,),
            in_specs=in_specs,
            out_specs=pl.BlockSpec((rows_per_block, D), lambda i: (i, 0)),
            scratch_shapes=[pltpu.VMEM((rows_per_block, D), jnp.float32)],
        ),
        compiler_params=pltpu.CompilerParams(
            # batch-block axis is independent -> v7x can shard it across 2 TCs
            dimension_semantics=("parallel",),
            vmem_limit_bytes=_vmem_limit_bytes(),
        ),
    )(x2d, wqkv, bqkv, wo, w1, bf1, w2, vecs)

    return out2d.reshape(B, S, D)


def encoder_layer_ref(x, p, *, num_heads):
    """Pure-JAX f32 reference (mirrors the PyTorch module)."""
    B, S, D = x.shape
    dk = D // num_heads
    q = x @ p['wq'] + p['bq'][0]
    k = x @ p['wk'] + p['bk'][0]
    v = x @ p['wv'] + p['bv'][0]
    qh = q.reshape(B, S, num_heads, dk)
    kh = k.reshape(B, S, num_heads, dk)
    vh = v.reshape(B, S, num_heads, dk)
    s = jnp.einsum('bshd,bthd->bhst', qh, kh) / jnp.sqrt(jnp.float32(dk))
    a = jax.nn.softmax(s, axis=-1)
    ctx = jnp.einsum('bhst,bthd->bshd', a, vh).reshape(B, S, D)
    attn_out = ctx @ p['wo'] + p['bo'][0]
    x1 = _layer_norm(x + attn_out, p['g1'][0], p['be1'][0])
    h = jnp.maximum(x1 @ p['w1'] + p['bf1'][0], 0.0)
    ff = h @ p['w2'] + p['bf2'][0]
    return _layer_norm(x1 + ff, p['g2'][0], p['be2'][0])


def make_params(key, d_model, d_hid):
    D, H = d_model, d_hid
    ks = jax.random.split(key, 6)
    scale = 0.05
    return {
        'wq': scale * jax.random.normal(ks[0], (D, D), jnp.float32),
        'wk': scale * jax.random.normal(ks[1], (D, D), jnp.float32),
        'wv': scale * jax.random.normal(ks[2], (D, D), jnp.float32),
        'wo': scale * jax.random.normal(ks[3], (D, D), jnp.float32),
        'bq': jnp.zeros((1, D), jnp.float32),
        'bk': jnp.zeros((1, D), jnp.float32),
        'bv': jnp.zeros((1, D), jnp.float32),
        'bo': jnp.zeros((1, D), jnp.float32),
        'g1': jnp.ones((1, D), jnp.float32),
        'be1': jnp.zeros((1, D), jnp.float32),
        'w1': scale * jax.random.normal(ks[4], (D, H), jnp.float32),
        'bf1': 0.01 * jnp.ones((1, H), jnp.float32),
        'w2': scale * jax.random.normal(ks[5], (H, D), jnp.float32),
        'bf2': 0.01 * jnp.ones((1, D), jnp.float32),
        'g2': jnp.ones((1, D), jnp.float32),
        'be2': jnp.zeros((1, D), jnp.float32),
    }


if __name__ == "__main__":
    # Small shapes implied by the module: (batch, seq, d_model)
    B, S, d_model, num_heads, d_hid = 2, 8, 32, 4, 64

    key = jax.random.PRNGKey(0)
    kx, kp = jax.random.split(key)
    x = jax.random.normal(kx, (B, S, d_model), jnp.float32)
    params = make_params(kp, d_model, d_hid)

    out = jax.block_until_ready(encoder_layer(x, params, num_heads=num_heads))

    ref = encoder_layer_ref(x, params, num_heads=num_heads)
    # bf16 matmul operands + approx reciprocal => looser tolerance vs f32 reference.
    np.testing.assert_allclose(np.asarray(out), np.asarray(ref),
                               rtol=2e-2, atol=2e-2)
    print("KERNEL_OK")
</pallas_src>

<mosaic_0001>
module attributes {stable_mosaic.version = 11 : i64} {
  func.func @encoder_layer_kernel(%arg0: i32, %arg1: memref<8x32xf32, #tpu.memory_space<vmem>>, %arg2: memref<32x96xbf16, #tpu.memory_space<vmem>>, %arg3: memref<1x96xf32, #tpu.memory_space<vmem>>, %arg4: memref<32x32xbf16, #tpu.memory_space<vmem>>, %arg5: memref<32x64xbf16, #tpu.memory_space<vmem>>, %arg6: memref<1x64xf32, #tpu.memory_space<vmem>>, %arg7: memref<64x32xbf16, #tpu.memory_space<vmem>>, %arg8: memref<6x32xf32, #tpu.memory_space<vmem>>, %arg9: memref<8x32xf32, #tpu.memory_space<vmem>>, %arg10: memref<8x32xf32, #tpu.memory_space<vmem>>) attributes {dimension_semantics = [#tpu.dimension_semantics<parallel>], iteration_bounds = array<i64: 2>, scalar_prefetch = 0 : i64, scratch_operands = 1 : i64, tpu.core_type = #tpu.core_type<tc>, window_params = [{transform_indices = @transform_0, window_bounds = array<i64: 8, 32>}, {pipeline_mode = #tpu.pipeline_mode<synchronous>, transform_indices = @transform_1, window_bounds = array<i64: 32, 96>}, {pipeline_mode = #tpu.pipeline_mode<synchronous>, transform_indices = @transform_2, window_bounds = array<i64: 1, 96>}, {pipeline_mode = #tpu.pipeline_mode<synchronous>, transform_indices = @transform_3, window_bounds = array<i64: 32, 32>}, {pipeline_mode = #tpu.pipeline_mode<synchronous>, transform_indices = @transform_4, window_bounds = array<i64: 32, 64>}, {pipeline_mode = #tpu.pipeline_mode<synchronous>, transform_indices = @transform_5, window_bounds = array<i64: 1, 64>}, {pipeline_mode = #tpu.pipeline_mode<synchronous>, transform_indices = @transform_6, window_bounds = array<i64: 64, 32>}, {pipeline_mode = #tpu.pipeline_mode<synchronous>, transform_indices = @transform_7, window_bounds = array<i64: 6, 32>}, {transform_indices = @transform_8, window_bounds = array<i64: 8, 32>}]} {
    %c0 = arith.constant 0 : index
    %c0_0 = arith.constant 0 : index
    %0 = vector.load %arg1[%c0, %c0_0] : memref<8x32xf32, #tpu.memory_space<vmem>>, vector<8x32xf32>
    %1 = arith.truncf %0 : vector<8x32xf32> to vector<8x32xbf16>
    %c0_1 = arith.constant 0 : index
    %c0_2 = arith.constant 0 : index
    %2 = vector.load %arg2[%c0_1, %c0_2] : memref<32x96xbf16, #tpu.memory_space<vmem>>, vector<32x96xbf16>
    %cst = arith.constant dense<0.000000e+00> : vector<8x96xf32>
    %3 = tpu.matmul %1, %2, %cst {dimension_numbers = #tpu.dot_dimension_numbers<[1], [0], [0], [1], [0, 0, 1, 1], [], []>} : vector<8x32xbf16>, vector<32x96xbf16>, vector<8x96xf32> -> vector<8x96xf32>
    %c0_3 = arith.constant 0 : index
    %c0_4 = arith.constant 0 : index
    %4 = vector.load %arg3[%c0_3, %c0_4] : memref<1x96xf32, #tpu.memory_space<vmem>>, vector<1x96xf32>
    %5 = vector.shape_cast %4 : vector<1x96xf32> to vector<96xf32>
    %6 = vector.shape_cast %5 : vector<96xf32> to vector<1x96xf32>
    %7 = vector.broadcast %6 : vector<1x96xf32> to vector<8x96xf32>
    %8 = arith.addf %3, %7 : vector<8x96xf32>
    %9 = arith.truncf %8 : vector<8x96xf32> to vector<8x96xbf16>
    %10 = vector.extract_strided_slice %9 {offsets = [0, 0], sizes = [8, 8], strides = [1, 1]} : vector<8x96xbf16> to vector<8x8xbf16>
    %11 = vector.extract_strided_slice %9 {offsets = [0, 32], sizes = [8, 8], strides = [1, 1]} : vector<8x96xbf16> to vector<8x8xbf16>
    %12 = tpu.transpose %11, [1, 0] : vector<8x8xbf16> -> vector<8x8xbf16>
    %cst_5 = arith.constant dense<0.000000e+00> : vector<8x8xf32>
    %13 = tpu.matmul %10, %12, %cst_5 {dimension_numbers = #tpu.dot_dimension_numbers<[1], [0], [0], [1], [0, 0, 1, 1], [], []>} : vector<8x8xbf16>, vector<8x8xbf16>, vector<8x8xf32> -> vector<8x8xf32>
    %cst_6 = arith.constant dense<0xFF800000> : vector<8xf32>
    %14 = vector.multi_reduction <maximumf>, %13, %cst_6 [1] : vector<8x8xf32> to vector<8xf32>
    %15 = vector.shape_cast %14 : vector<8xf32> to vector<8x1xf32>
    %16 = vector.broadcast %15 : vector<8x1xf32> to vector<8x8xf32>
    %17 = arith.subf %13, %16 : vector<8x8xf32>
    %18 = math.exp %17 : vector<8x8xf32>
    %cst_7 = arith.constant dense<0.000000e+00> : vector<8xf32>
    %19 = vector.multi_reduction <add>, %18, %cst_7 [1] : vector<8x8xf32> to vector<8xf32>
    %20 = vector.shape_cast %19 : vector<8xf32> to vector<8x1xf32>
    %21 = tpu.reciprocal %20 {approx = true} : vector<8x1xf32> -> vector<8x1xf32>
    %22 = vector.broadcast %21 : vector<8x1xf32> to vector<8x8xf32>
    %23 = arith.mulf %18, %22 : vector<8x8xf32>
    %24 = arith.truncf %23 : vector<8x8xf32> to vector<8x8xbf16>
    %25 = vector.extract_strided_slice %9 {offsets = [0, 64], sizes = [8, 8], strides = [1, 1]} : vector<8x96xbf16> to vector<8x8xbf16>
    %cst_8 = arith.constant dense<0.000000e+00> : vector<8x8xf32>
    %26 = tpu.matmul %24, %25, %cst_8 {dimension_numbers = #tpu.dot_dimension_numbers<[1], [0], [0], [1], [0, 0, 1, 1], [], []>} : vector<8x8xbf16>, vector<8x8xbf16>, vector<8x8xf32> -> vector<8x8xf32>
    %c0_9 = arith.constant 0 : index
    %c0_10 = arith.constant 0 : index
    %27 = vector.load %arg10[%c0_9, %c0_10] : memref<8x32xf32, #tpu.memory_space<vmem>>, vector<8x8xf32>
    tpu.vector_store %arg10[%c0_9, %c0_10], %26 {strides = array<i32>} : memref<8x32xf32, #tpu.memory_space<vmem>>, vector<8x8xf32>,
    %28 = vector.extract_strided_slice %9 {offsets = [0, 8], sizes = [8, 8], strides = [1, 1]} : vector<8x96xbf16> to vector<8x8xbf16>
    %29 = vector.extract_strided_slice %9 {offsets = [0, 40], sizes = [8, 8], strides = [1, 1]} : vector<8x96xbf16> to vector<8x8xbf16>
    %30 = tpu.transpose %29, [1, 0] : vector<8x8xbf16> -> vector<8x8xbf16>
    %cst_11 = arith.constant dense<0.000000e+00> : vector<8x8xf32>
    %31 = tpu.matmul %28, %30, %cst_11 {dimension_numbers = #tpu.dot_dimension_numbers<[1], [0], [0], [1], [0, 0, 1, 1], [], []>} : vector<8x8xbf16>, vector<8x8xbf16>, vector<8x8xf32> -> vector<8x8xf32>
    %cst_12 = arith.constant dense<0xFF800000> : vector<8xf32>
    %32 = vector.multi_reduction <maximumf>, %31, %cst_12 [1] : vector<8x8xf32> to vector<8xf32>
    %33 = vector.shape_cast %32 : vector<8xf32> to vector<8x1xf32>
    %34 = vector.broadcast %33 : vector<8x1xf32> to vector<8x8xf32>
    %35 = arith.subf %31, %34 : vector<8x8xf32>
    %36 = math.exp %35 : vector<8x8xf32>
    %cst_13 = arith.constant dense<0.000000e+00> : vector<8xf32>
    %37 = vector.multi_reduction <add>, %36, %cst_13 [1] : vector<8x8xf32> to vector<8xf32>
    %38 = vector.shape_cast %37 : vector<8xf32> to vector<8x1xf32>
    %39 = tpu.reciprocal %38 {approx = true} : vector<8x1xf32> -> vector<8x1xf32>
    %40 = vector.broadcast %39 : vector<8x1xf32> to vector<8x8xf32>
    %41 = arith.mulf %36, %40 : vector<8x8xf32>
    %42 = arith.truncf %41 : vector<8x8xf32> to vector<8x8xbf16>
    %43 = vector.extract_strided_slice %9 {offsets = [0, 72], sizes = [8, 8], strides = [1, 1]} : vector<8x96xbf16> to vector<8x8xbf16>
    %cst_14 = arith.constant dense<0.000000e+00> : vector<8x8xf32>
    %44 = tpu.matmul %42, %43, %cst_14 {dimension_numbers = #tpu.dot_dimension_numbers<[1], [0], [0], [1], [0, 0, 1, 1], [], []>} : vector<8x8xbf16>, vector<8x8xbf16>, vector<8x8xf32> -> vector<8x8xf32>
    %c0_15 = arith.constant 0 : index
    %c8 = arith.constant 8 : index
    %45 = vector.load %arg10[%c0_15, %c8] : memref<8x32xf32, #tpu.memory_space<vmem>>, vector<8x8xf32>
    tpu.vector_store %arg10[%c0_15, %c8], %44 {strides = array<i32>} : memref<8x32xf32, #tpu.memory_space<vmem>>, vector<8x8xf32>,
    %46 = vector.extract_strided_slice %9 {offsets = [0, 16], sizes = [8, 8], strides = [1, 1]} : vector<8x96xbf16> to vector<8x8xbf16>
    %47 = vector.extract_strided_slice %9 {offsets = [0, 48], sizes = [8, 8], strides = [1, 1]} : vector<8x96xbf16> to vector<8x8xbf16>
    %48 = tpu.transpose %47, [1, 0] : vector<8x8xbf16> -> vector<8x8xbf16>
    %cst_16 = arith.constant dense<0.000000e+00> : vector<8x8xf32>
    %49 = tpu.matmul %46, %48, %cst_16 {dimension_numbers = #tpu.dot_dimension_numbers<[1], [0], [0], [1], [0, 0, 1, 1], [], []>} : vector<8x8xbf16>, vector<8x8xbf16>, vector<8x8xf32> -> vector<8x8xf32>
    %cst_17 = arith.constant dense<0xFF800000> : vector<8xf32>
    %50 = vector.multi_reduction <maximumf>, %49, %cst_17 [1] : vector<8x8xf32> to vector<8xf32>
    %51 = vector.shape_cast %50 : vector<8xf32> to vector<8x1xf32>
    %52 = vector.broadcast %51 : vector<8x1xf32> to vector<8x8xf32>
    %53 = arith.subf %49, %52 : vector<8x8xf32>
    %54 = math.exp %53 : vector<8x8xf32>
    %cst_18 = arith.constant dense<0.000000e+00> : vector<8xf32>
    %55 = vector.multi_reduction <add>, %54, %cst_18 [1] : vector<8x8xf32> to vector<8xf32>
    %56 = vector.shape_cast %55 : vector<8xf32> to vector<8x1xf32>
    %57 = tpu.reciprocal %56 {approx = true} : vector<8x1xf32> -> vector<8x1xf32>
    %58 = vector.broadcast %57 : vector<8x1xf32> to vector<8x8xf32>
    %59 = arith.mulf %54, %58 : vector<8x8xf32>
    %60 = arith.truncf %59 : vector<8x8xf32> to vector<8x8xbf16>
    %61 = vector.extract_strided_slice %9 {offsets = [0, 80], sizes = [8, 8], strides = [1, 1]} : vector<8x96xbf16> to vector<8x8xbf16>
    %cst_19 = arith.constant dense<0.000000e+00> : vector<8x8xf32>
    %62 = tpu.matmul %60, %61, %cst_19 {dimension_numbers = #tpu.dot_dimension_numbers<[1], [0], [0], [1], [0, 0, 1, 1], [], []>} : vector<8x8xbf16>, vector<8x8xbf16>, vector<8x8xf32> -> vector<8x8xf32>
    %c0_20 = arith.constant 0 : index
    %c16 = arith.constant 16 : index
    %63 = vector.load %arg10[%c0_20, %c16] : memref<8x32xf32, #tpu.memory_space<vmem>>, vector<8x8xf32>
    tpu.vector_store %arg10[%c0_20, %c16], %62 {strides = array<i32>} : memref<8x32xf32, #tpu.memory_space<vmem>>, vector<8x8xf32>,
    %64 = vector.extract_strided_slice %9 {offsets = [0, 24], sizes = [8, 8], strides = [1, 1]} : vector<8x96xbf16> to vector<8x8xbf16>
    %65 = vector.extract_strided_slice %9 {offsets = [0, 56], sizes = [8, 8], strides = [1, 1]} : vector<8x96xbf16> to vector<8x8xbf16>
    %66 = tpu.transpose %65, [1, 0] : vector<8x8xbf16> -> vector<8x8xbf16>
    %cst_21 = arith.constant dense<0.000000e+00> : vector<8x8xf32>
    %67 = tpu.matmul %64, %66, %cst_21 {dimension_numbers = #tpu.dot_dimension_numbers<[1], [0], [0], [1], [0, 0, 1, 1], [], []>} : vector<8x8xbf16>, vector<8x8xbf16>, vector<8x8xf32> -> vector<8x8xf32>
    %cst_22 = arith.constant dense<0xFF800000> : vector<8xf32>
    %68 = vector.multi_reduction <maximumf>, %67, %cst_22 [1] : vector<8x8xf32> to vector<8xf32>
    %69 = vector.shape_cast %68 : vector<8xf32> to vector<8x1xf32>
    %70 = vector.broadcast %69 : vector<8x1xf32> to vector<8x8xf32>
    %71 = arith.subf %67, %70 : vector<8x8xf32>
    %72 = math.exp %71 : vector<8x8xf32>
    %cst_23 = arith.constant dense<0.000000e+00> : vector<8xf32>
    %73 = vector.multi_reduction <add>, %72, %cst_23 [1] : vector<8x8xf32> to vector<8xf32>
    %74 = vector.shape_cast %73 : vector<8xf32> to vector<8x1xf32>
    %75 = tpu.reciprocal %74 {approx = true} : vector<8x1xf32> -> vector<8x1xf32>
    %76 = vector.broadcast %75 : vector<8x1xf32> to vector<8x8xf32>
    %77 = arith.mulf %72, %76 : vector<8x8xf32>
    %78 = arith.truncf %77 : vector<8x8xf32> to vector<8x8xbf16>
    %79 = vector.extract_strided_slice %9 {offsets = [0, 88], sizes = [8, 8], strides = [1, 1]} : vector<8x96xbf16> to vector<8x8xbf16>
    %cst_24 = arith.constant dense<0.000000e+00> : vector<8x8xf32>
    %80 = tpu.matmul %78, %79, %cst_24 {dimension_numbers = #tpu.dot_dimension_numbers<[1], [0], [0], [1], [0, 0, 1, 1], [], []>} : vector<8x8xbf16>, vector<8x8xbf16>, vector<8x8xf32> -> vector<8x8xf32>
    %c0_25 = arith.constant 0 : index
    %c24 = arith.constant 24 : index
    %81 = vector.load %arg10[%c0_25, %c24] : memref<8x32xf32, #tpu.memory_space<vmem>>, vector<8x8xf32>
    tpu.vector_store %arg10[%c0_25, %c24], %80 {strides = array<i32>} : memref<8x32xf32, #tpu.memory_space<vmem>>, vector<8x8xf32>,
    %c0_26 = arith.constant 0 : index
    %c0_27 = arith.constant 0 : index
    %82 = vector.load %arg10[%c0_26, %c0_27] : memref<8x32xf32, #tpu.memory_space<vmem>>, vector<8x32xf32>
    %83 = arith.truncf %82 : vector<8x32xf32> to vector<8x32xbf16>
    %c0_28 = arith.constant 0 : index
    %c0_29 = arith.constant 0 : index
    %84 = vector.load %arg4[%c0_28, %c0_29] : memref<32x32xbf16, #tpu.memory_space<vmem>>, vector<32x32xbf16>
    %cst_30 = arith.constant dense<0.000000e+00> : vector<8x32xf32>
    %85 = tpu.matmul %83, %84, %cst_30 {dimension_numbers = #tpu.dot_dimension_numbers<[1], [0], [0], [1], [0, 0, 1, 1], [], []>} : vector<8x32xbf16>, vector<32x32xbf16>, vector<8x32xf32> -> vector<8x32xf32>
    %c0_31 = arith.constant 0 : index
    %c0_32 = arith.constant 0 : index
    %86 = vector.load %arg8[%c0_31, %c0_32] : memref<6x32xf32, #tpu.memory_space<vmem>>, vector<1x32xf32>
    %87 = vector.shape_cast %86 : vector<1x32xf32> to vector<32xf32>
    %88 = vector.shape_cast %87 : vector<32xf32> to vector<1x32xf32>
    %89 = vector.broadcast %88 : vector<1x32xf32> to vector<8x32xf32>
    %90 = arith.addf %85, %89 : vector<8x32xf32>
    %91 = arith.addf %0, %90 : vector<8x32xf32>
    %c1 = arith.constant 1 : index
    %c0_33 = arith.constant 0 : index
    %92 = vector.load %arg8[%c1, %c0_33] : memref<6x32xf32, #tpu.memory_space<vmem>>, vector<1x32xf32>
    %93 = vector.shape_cast %92 : vector<1x32xf32> to vector<32xf32>
    %c2 = arith.constant 2 : index
    %c0_34 = arith.constant 0 : index
    %94 = vector.load %arg8[%c2, %c0_34] : memref<6x32xf32, #tpu.memory_space<vmem>>, vector<1x32xf32>
    %95 = vector.shape_cast %94 : vector<1x32xf32> to vector<32xf32>
    %cst_35 = arith.constant dense<0.000000e+00> : vector<8xf32>
    %96 = vector.multi_reduction <add>, %91, %cst_35 [1] : vector<8x32xf32> to vector<8xf32>
    %97 = vector.shape_cast %96 : vector<8xf32> to vector<8x1xf32>
    %cst_36 = arith.constant 3.200000e+01 : f32
    %98 = vector.broadcast %cst_36 : f32 to vector<8x1xf32>
    %99 = arith.divf %97, %98 : vector<8x1xf32>
    %100 = vector.broadcast %99 : vector<8x1xf32> to vector<8x32xf32>
    %101 = arith.subf %91, %100 : vector<8x32xf32>
    %102 = arith.mulf %101, %101 : vector<8x32xf32>
    %cst_37 = arith.constant dense<0.000000e+00> : vector<8xf32>
    %103 = vector.multi_reduction <add>, %102, %cst_37 [1] : vector<8x32xf32> to vector<8xf32>
    %104 = vector.shape_cast %103 : vector<8xf32> to vector<8x1xf32>
    %cst_38 = arith.constant 3.200000e+01 : f32
    %105 = vector.broadcast %cst_38 : f32 to vector<8x1xf32>
    %106 = arith.divf %104, %105 : vector<8x1xf32>
    %107 = vector.broadcast %99 : vector<8x1xf32> to vector<8x32xf32>
    %108 = arith.subf %91, %107 : vector<8x32xf32>
    %cst_39 = arith.constant 9.99999997E-7 : f32
    %109 = vector.broadcast %cst_39 : f32 to vector<8x1xf32>
    %110 = arith.addf %106, %109 : vector<8x1xf32>
    %111 = math.rsqrt %110 : vector<8x1xf32>
    %112 = vector.broadcast %111 : vector<8x1xf32> to vector<8x32xf32>
    %113 = arith.mulf %108, %112 : vector<8x32xf32>
    %114 = vector.shape_cast %93 : vector<32xf32> to vector<1x32xf32>
    %115 = vector.broadcast %114 : vector<1x32xf32> to vector<8x32xf32>
    %116 = arith.mulf %113, %115 : vector<8x32xf32>
    %117 = vector.shape_cast %95 : vector<32xf32> to vector<1x32xf32>
    %118 = vector.broadcast %117 : vector<1x32xf32> to vector<8x32xf32>
    %119 = arith.addf %116, %118 : vector<8x32xf32>
    %120 = arith.truncf %119 : vector<8x32xf32> to vector<8x32xbf16>
    %c0_40 = arith.constant 0 : index
    %c0_41 = arith.constant 0 : index
    %121 = vector.load %arg5[%c0_40, %c0_41] : memref<32x64xbf16, #tpu.memory_space<vmem>>, vector<32x64xbf16>
    %cst_42 = arith.constant dense<0.000000e+00> : vector<8x64xf32>
    %122 = tpu.matmul %120, %121, %cst_42 {dimension_numbers = #tpu.dot_dimension_numbers<[1], [0], [0], [1], [0, 0, 1, 1], [], []>} : vector<8x32xbf16>, vector<32x64xbf16>, vector<8x64xf32> -> vector<8x64xf32>
    %c0_43 = arith.constant 0 : index
    %c0_44 = arith.constant 0 : index
    %123 = vector.load %arg6[%c0_43, %c0_44] : memref<1x64xf32, #tpu.memory_space<vmem>>, vector<1x64xf32>
    %124 = vector.shape_cast %123 : vector<1x64xf32> to vector<64xf32>
    %125 = vector.shape_cast %124 : vector<64xf32> to vector<1x64xf32>
    %126 = vector.broadcast %125 : vector<1x64xf32> to vector<8x64xf32>
    %127 = arith.addf %122, %126 : vector<8x64xf32>
    %cst_45 = arith.constant 0.000000e+00 : f32
    %128 = vector.broadcast %cst_45 : f32 to vector<8x64xf32>
    %129 = arith.maximumf %127, %128 : vector<8x64xf32>
    %130 = arith.truncf %129 : vector<8x64xf32> to vector<8x64xbf16>
    %c0_46 = arith.constant 0 : index
    %c0_47 = arith.constant 0 : index
    %131 = vector.load %arg7[%c0_46, %c0_47] : memref<64x32xbf16, #tpu.memory_space<vmem>>, vector<64x32xbf16>
    %cst_48 = arith.constant dense<0.000000e+00> : vector<8x32xf32>
    %132 = tpu.matmul %130, %131, %cst_48 {dimension_numbers = #tpu.dot_dimension_numbers<[1], [0], [0], [1], [0, 0, 1, 1], [], []>} : vector<8x64xbf16>, vector<64x32xbf16>, vector<8x32xf32> -> vector<8x32xf32>
    %c3 = arith.constant 3 : index
    %c0_49 = arith.constant 0 : index
    %133 = vector.load %arg8[%c3, %c0_49] : memref<6x32xf32, #tpu.memory_space<vmem>>, vector<1x32xf32>
    %134 = vector.shape_cast %133 : vector<1x32xf32> to vector<32xf32>
    %135 = vector.shape_cast %134 : vector<32xf32> to vector<1x32xf32>
    %136 = vector.broadcast %135 : vector<1x32xf32> to vector<8x32xf32>
    %137 = arith.addf %132, %136 : vector<8x32xf32>
    %138 = arith.addf %119, %137 : vector<8x32xf32>
    %c4 = arith.constant 4 : index
    %c0_50 = arith.constant 0 : index
    %139 = vector.load %arg8[%c4, %c0_50] : memref<6x32xf32, #tpu.memory_space<vmem>>, vector<1x32xf32>
    %140 = vector.shape_cast %139 : vector<1x32xf32> to vector<32xf32>
    %c5 = arith.constant 5 : index
    %c0_51 = arith.constant 0 : index
    %141 = vector.load %arg8[%c5, %c0_51] : memref<6x32xf32, #tpu.memory_space<vmem>>, vector<1x32xf32>
    %142 = vector.shape_cast %141 : vector<1x32xf32> to vector<32xf32>
    %cst_52 = arith.constant dense<0.000000e+00> : vector<8xf32>
    %143 = vector.multi_reduction <add>, %138, %cst_52 [1] : vector<8x32xf32> to vector<8xf32>
    %144 = vector.shape_cast %143 : vector<8xf32> to vector<8x1xf32>
    %cst_53 = arith.constant 3.200000e+01 : f32
    %145 = vector.broadcast %cst_53 : f32 to vector<8x1xf32>
    %146 = arith.divf %144, %145 : vector<8x1xf32>
    %147 = vector.broadcast %146 : vector<8x1xf32> to vector<8x32xf32>
    %148 = arith.subf %138, %147 : vector<8x32xf32>
    %149 = arith.mulf %148, %148 : vector<8x32xf32>
    %cst_54 = arith.constant dense<0.000000e+00> : vector<8xf32>
    %150 = vector.multi_reduction <add>, %149, %cst_54 [1] : vector<8x32xf32> to vector<8xf32>
    %151 = vector.shape_cast %150 : vector<8xf32> to vector<8x1xf32>
    %cst_55 = arith.constant 3.200000e+01 : f32
    %152 = vector.broadcast %cst_55 : f32 to vector<8x1xf32>
    %153 = arith.divf %151, %152 : vector<8x1xf32>
    %154 = vector.broadcast %146 : vector<8x1xf32> to vector<8x32xf32>
    %155 = arith.subf %138, %154 : vector<8x32xf32>
    %cst_56 = arith.constant 9.99999997E-7 : f32
    %156 = vector.broadcast %cst_56 : f32 to vector<8x1xf32>
    %157 = arith.addf %153, %156 : vector<8x1xf32>
    %158 = math.rsqrt %157 : vector<8x1xf32>
    %159 = vector.broadcast %158 : vector<8x1xf32> to vector<8x32xf32>
    %160 = arith.mulf %155, %159 : vector<8x32xf32>
    %161 = vector.shape_cast %140 : vector<32xf32> to vector<1x32xf32>
    %162 = vector.broadcast %161 : vector<1x32xf32> to vector<8x32xf32>
    %163 = arith.mulf %160, %162 : vector<8x32xf32>
    %164 = vector.shape_cast %142 : vector<32xf32> to vector<1x32xf32>
    %165 = vector.broadcast %164 : vector<1x32xf32> to vector<8x32xf32>
    %166 = arith.addf %163, %165 : vector<8x32xf32>
    %c0_57 = arith.constant 0 : index
    %c0_58 = arith.constant 0 : index
    %167 = vector.load %arg9[%c0_57, %c0_58] : memref<8x32xf32, #tpu.memory_space<vmem>>, vector<8x32xf32>
    tpu.vector_store %arg9[%c0_57, %c0_58], %166 {strides = array<i32>} : memref<8x32xf32, #tpu.memory_space<vmem>>, vector<8x32xf32>,
    return
  }
  func.func @transform_0(%arg0: i32) -> (i32, i32) {
    %c0_i32 = arith.constant 0 : i32
    %c0_i32_0 = arith.constant 0 : i32
    return %arg0, %c0_i32 : i32, i32
  }
  func.func @transform_1(%arg0: i32) -> (i32, i32) {
    %c0_i32 = arith.constant 0 : i32
    %c0_i32_0 = arith.constant 0 : i32
    %c0_i32_1 = arith.constant 0 : i32
    return %c0_i32, %c0_i32_0 : i32, i32
  }
  func.func @transform_2(%arg0: i32) -> (i32, i32) {
    %c0_i32 = arith.constant 0 : i32
    %c0_i32_0 = arith.constant 0 : i32
    %c0_i32_1 = arith.constant 0 : i32
    return %c0_i32, %c0_i32_0 : i32, i32
  }
  func.func @transform_3(%arg0: i32) -> (i32, i32) {
    %c0_i32 = arith.constant 0 : i32
    %c0_i32_0 = arith.constant 0 : i32
    %c0_i32_1 = arith.constant 0 : i32
    return %c0_i32, %c0_i32_0 : i32, i32
  }
  func.func @transform_4(%arg0: i32) -> (i32, i32) {
    %c0_i32 = arith.constant 0 : i32
    %c0_i32_0 = arith.constant 0 : i32
    %c0_i32_1 = arith.constant 0 : i32
    return %c0_i32, %c0_i32_0 : i32, i32
  }
  func.func @transform_5(%arg0: i32) -> (i32, i32) {
    %c0_i32 = arith.constant 0 : i32
    %c0_i32_0 = arith.constant 0 : i32
    %c0_i32_1 = arith.constant 0 : i32
    return %c0_i32, %c0_i32_0 : i32, i32
  }
  func.func @transform_6(%arg0: i32) -> (i32, i32) {
    %c0_i32 = arith.constant 0 : i32
    %c0_i32_0 = arith.constant 0 : i32
    %c0_i32_1 = arith.constant 0 : i32
    return %c0_i32, %c0_i32_0 : i32, i32
  }
  func.func @transform_7(%arg0: i32) -> (i32, i32) {
    %c0_i32 = arith.constant 0 : i32
    %c0_i32_0 = arith.constant 0 : i32
    %c0_i32_1 = arith.constant 0 : i32
    return %c0_i32, %c0_i32_0 : i32, i32
  }
  func.func @transform_8(%arg0: i32) -> (i32, i32) {
    %c0_i32 = arith.constant 0 : i32
    %c0_i32_0 = arith.constant 0 : i32
    return %arg0, %c0_i32 : i32, i32
  }
}

</mosaic_0001>

<llo_original>
// kernel: tpu_custom_call.1
$region0: #{tpu_custom_call.1}
  #allocation0 [shape = 'u32[]', space=smem, size = 0x4, offset = 0x4, fixed_abs, tag = 'smem constant byte address 0x4 - core index']
  #allocation1 [shape = 'u32[144,128]{1,0:T(1,128)}', space=vmem, size = 0x12000, scoped, tag = 'internal scratch']
  #allocation2 [shape = 'f32[8,32]{1,0:T(8,128)}', space=vmem, size = 0x1000, scoped, tag = 'scratch operand']
  %s0 = inlined_call_operand.vmem [shape: f32[16,32], index: 0, kind: input, shape index: {}]
  %s1 = inlined_call_operand.vmem [shape: bf16[32,96], index: 1, kind: input, shape index: {}]
  %s2 = inlined_call_operand.vmem [shape: f32[1,96], index: 2, kind: input, shape index: {}]
  %s3 = inlined_call_operand.vmem [shape: bf16[32,32], index: 3, kind: input, shape index: {}]
  %s4 = inlined_call_operand.hbm [shape: bf16[32,64], index: 4, kind: input, shape index: {}]
  %s5 = inlined_call_operand.hbm [shape: f32[1,64], index: 5, kind: input, shape index: {}]
  %s6 = inlined_call_operand.vmem [shape: bf16[64,32], index: 6, kind: input, shape index: {}]
  %s7 = inlined_call_operand.vmem [shape: f32[6,32], index: 7, kind: input, shape index: {}]
  %s8 = inlined_call_operand.hbm [shape: f32[16,32], index: 8, kind: output, shape index: {}]
  %s9 = sld [smem:[#allocation0]]
  $region73: #{tpu_custom_call.1} parent=0
    _
  %s11 = ssub.s32 1, %s9
  %s12 = scalar_select 0, %s11, %s9
  $region1: #{tpu_custom_call.1} parent=0
    #allocation3 [shape = 'u8[8192]{0}', space=vmem, size = 0x2000, scoped, tag = 'input window, operand 4, single buffered']
    #allocation4 [shape = 's32[2]{0}', space=sflag, size = 0x8, scoped, tag = 'scoped memory for tpu_custom_call.1']
    #allocation5 [shape = 's32[2]{0}', space=sflag, size = 0x8, scoped, tag = 'scoped memory for tpu_custom_call.1']
    #allocation6 [shape = 'u8[512]{0}', space=vmem, size = 0x400, scoped, tag = 'input window, operand 5, single buffered']
    #allocation7 [shape = 's32[1]{0}', space=sflag, size = 0x4, scoped, tag = 'scoped memory for tpu_custom_call.1']
    #allocation8 [shape = 'u8[8192]{0}', space=vmem, size = 0x2000, scoped, tag = 'output window, operand 0']
    %13 = vsyncpa [#allocation4], 0
    %14 = vsyncpa [#allocation7], 0
    %15 = vsyncpa [#allocation5], 0
    %s16 = scalar_lea.sflag [#allocation5], 1
    %17 = vsyncpa %s16, 0
    loop: start=0, step=1, limit=4
    $region2: #{tpu_custom_call.1} parent=1 // loop_pre_header
      _
    $region3: #{tpu_custom_call.1} parent=1 // loop_header
      %s19 = sphi 0, %s23
      %p20 = scmp.ge.s32.totalorder %s19, 4
      %s29 = sphi 0, %s31
      %s32 = sphi 0, %s29
      %s33 = sphi 0, %s32
      %s49 = sphi 0, %s33
      %s53 = sphi 0, %s53
      %s55 = sphi 0, %s53
      %s56 = sphi 0, %s55
      %s70 = sphi 0, %s56
      %s74 = sphi 0, %s74
      %s76 = sphi 0, %s74
      %s77 = sphi 0, %s76
      %s91 = sphi 0, %s77
      %s95 = sphi 0, %s95
      %s97 = sphi 0, %s95
      %s98 = sphi 0, %s97
      %s112 = sphi 0, %s98
      %s116 = sphi 0, %s116
      %s118 = sphi 0, %s116
      %s119 = sphi 0, %s118
      %s133 = sphi 0, %s119
      %s137 = sphi 0, %s137
      %s139 = sphi 0, %s137
      %s140 = sphi 0, %s139
      %s154 = sphi 0, %s140
      %s158 = sphi 0, %s158
      %s160 = sphi 0, %s158
      %s161 = sphi 0, %s160
      %s175 = sphi 0, %s161
      %s179 = sphi 0, %s179
      %s181 = sphi 0, %s179
      %s182 = sphi 0, %s181
      %s196 = sphi 0, %s182
      %s202 = sphi 0, %s204
      %s205 = sphi 0, %s202
      %s206 = sphi 0, %s205
      %s222 = sphi 0, %s206
    $region4: #{tpu_custom_call.1} parent=1 // loop_header_branch
      %22 = sbr.rel (%p20) target = $region8
    $region5: #{tpu_custom_call.1} parent=1 // loop_body
      %s24 = ssub.s32 %s19, 1
      %s25 = ssub.s32 %s19, 2
      %s26 = sadd.s32 %s19, 1
      %s27 = ssub.s32 %s19, %s26
      %p28 = scmp.eq.s32.totalorder %s27, 0
      %s30 = sadd.s32 %s29, 1
      %s31 = scalar_select %p28, %s29, %s30
      %p34 = pneg %p28
      %p35 = scmp.eq.s32.totalorder %s19, 1
      %p36 = por %p34, %p35
      %p37 = scmp.ne.s32.totalorder %s29, %s32
      %p38 = scmp.eq.s32.totalorder %s19, 0
      %p39 = por %p37, %p38
      %p40 = scmp.ne.s32.totalorder %s29, %s32
      %p41 = scmp.eq.s32.totalorder %s24, 1
      %p42 = por %p40, %p41
      %p43 = scmp.ne.s32.totalorder %s32, %s33
      %p44 = scmp.eq.s32.totalorder %s24, 0
      %p45 = por %p43, %p44
      %p46 = scmp.ne.s32.totalorder %s32, %s33
      %p47 = scmp.eq.s32.totalorder %s25, 1
      %p48 = por %p46, %p47
      %p50 = scmp.ne.s32.totalorder %s33, %s49
      %p51 = scmp.eq.s32.totalorder %s25, 0
      %p52 = por %p50, %p51
      %s54 = sadd.s32 %s53, 1
      %p57 = scmp.eq.s32.totalorder %s19, 1
      %p58 = scmp.ne.s32.totalorder %s53, %s55
      %p59 = scmp.eq.s32.totalorder %s19, 0
      %p60 = por %p58, %p59
      %p61 = scmp.ne.s32.totalorder %s53, %s55
      %p62 = scmp.eq.s32.totalorder %s24, 1
      %p63 = por %p61, %p62
      %p64 = scmp.ne.s32.totalorder %s55, %s56
      %p65 = scmp.eq.s32.totalorder %s24, 0
      %p66 = por %p64, %p65
      %p67 = scmp.ne.s32.totalorder %s55, %s56
      %p68 = scmp.eq.s32.totalorder %s25, 1
      %p69 = por %p67, %p68
      %p71 = scmp.ne.s32.totalorder %s56, %s70
      %p72 = scmp.eq.s32.totalorder %s25, 0
      %p73 = por %p71, %p72
      %s75 = sadd.s32 %s74, 1
      %p78 = scmp.eq.s32.totalorder %s19, 1
      %p79 = scmp.ne.s32.totalorder %s74, %s76
      %p80 = scmp.eq.s32.totalorder %s19, 0
      %p81 = por %p79, %p80
      %p82 = scmp.ne.s32.totalorder %s74, %s76
      %p83 = scmp.eq.s32.totalorder %s24, 1
      %p84 = por %p82, %p83
      %p85 = scmp.ne.s32.totalorder %s76, %s77
      %p86 = scmp.eq.s32.totalorder %s24, 0
      %p87 = por %p85, %p86
      %p88 = scmp.ne.s32.totalorder %s76, %s77
      %p89 = scmp.eq.s32.totalorder %s25, 1
      %p90 = por %p88, %p89
      %p92 = scmp.ne.s32.totalorder %s77, %s91
      %p93 = scmp.eq.s32.totalorder %s25, 0
      %p94 = por %p92, %p93
      %s96 = sadd.s32 %s95, 1
      %p99 = scmp.eq.s32.totalorder %s19, 1
      %p100 = scmp.ne.s32.totalorder %s95, %s97
      %p101 = scmp.eq.s32.totalorder %s19, 0
      %p102 = por %p100, %p101
      %p103 = scmp.ne.s32.totalorder %s95, %s97
      %p104 = scmp.eq.s32.totalorder %s24, 1
      %p105 = por %p103, %p104
      %p106 = scmp.ne.s32.totalorder %s97, %s98
      %p107 = scmp.eq.s32.totalorder %s24, 0
      %p108 = por %p106, %p107
      %p109 = scmp.ne.s32.totalorder %s97, %s98
      %p110 = scmp.eq.s32.totalorder %s25, 1
      %p111 = por %p109, %p110
      %p113 = scmp.ne.s32.totalorder %s98, %s112
      %p114 = scmp.eq.s32.totalorder %s25, 0
      %p115 = por %p113, %p114
      %s117 = sadd.s32 %s116, 1
      %p120 = scmp.eq.s32.totalorder %s19, 1
      %p121 = scmp.ne.s32.totalorder %s116, %s118
      %p122 = scmp.eq.s32.totalorder %s19, 0
      %p123 = por %p121, %p122
      %p124 = scmp.ne.s32.totalorder %s116, %s118
      %p125 = scmp.eq.s32.totalorder %s24, 1
      %p126 = por %p124, %p125
      %p127 = scmp.ne.s32.totalorder %s118, %s119
      %p128 = scmp.eq.s32.totalorder %s24, 0
      %p129 = por %p127, %p128
      %p130 = scmp.ne.s32.totalorder %s118, %s119
      %p131 = scmp.eq.s32.totalorder %s25, 1
      %p132 = por %p130, %p131
      %p134 = scmp.ne.s32.totalorder %s119, %s133
      %p135 = scmp.eq.s32.totalorder %s25, 0
      %p136 = por %p134, %p135
      %s138 = sadd.s32 %s137, 1
      %p141 = scmp.eq.s32.totalorder %s19, 1
      %p142 = scmp.ne.s32.totalorder %s137, %s139
      %p143 = scmp.eq.s32.totalorder %s19, 0
      %p144 = por %p142, %p143
      %p145 = scmp.ne.s32.totalorder %s137, %s139
      %p146 = scmp.eq.s32.totalorder %s24, 1
      %p147 = por %p145, %p146
      %p148 = scmp.ne.s32.totalorder %s139, %s140
      %p149 = scmp.eq.s32.totalorder %s24, 0
      %p150 = por %p148, %p149
      %p151 = scmp.ne.s32.totalorder %s139, %s140
      %p152 = scmp.eq.s32.totalorder %s25, 1
      %p153 = por %p151, %p152
      %p155 = scmp.ne.s32.totalorder %s140, %s154
      %p156 = scmp.eq.s32.totalorder %s25, 0
      %p157 = por %p155, %p156
      %s159 = sadd.s32 %s158, 1
      %p162 = scmp.eq.s32.totalorder %s19, 1
      %p163 = scmp.ne.s32.totalorder %s158, %s160
      %p164 = scmp.eq.s32.totalorder %s19, 0
      %p165 = por %p163, %p164
      %p166 = scmp.ne.s32.totalorder %s158, %s160
      %p167 = scmp.eq.s32.totalorder %s24, 1
      %p168 = por %p166, %p167
      %p169 = scmp.ne.s32.totalorder %s160, %s161
      %p170 = scmp.eq.s32.totalorder %s24, 0
      %p171 = por %p169, %p170
      %p172 = scmp.ne.s32.totalorder %s160, %s161
      %p173 = scmp.eq.s32.totalorder %s25, 1
      %p174 = por %p172, %p173
      %p176 = scmp.ne.s32.totalorder %s161, %s175
      %p177 = scmp.eq.s32.totalorder %s25, 0
      %p178 = por %p176, %p177
      %s180 = sadd.s32 %s179, 1
      %p183 = scmp.eq.s32.totalorder %s19, 1
      %p184 = scmp.ne.s32.totalorder %s179, %s181
      %p185 = scmp.eq.s32.totalorder %s19, 0
      %p186 = por %p184, %p185
      %p187 = scmp.ne.s32.totalorder %s179, %s181
      %p188 = scmp.eq.s32.totalorder %s24, 1
      %p189 = por %p187, %p188
      %p190 = scmp.ne.s32.totalorder %s181, %s182
      %p191 = scmp.eq.s32.totalorder %s24, 0
      %p192 = por %p190, %p191
      %p193 = scmp.ne.s32.totalorder %s181, %s182
      %p194 = scmp.eq.s32.totalorder %s25, 1
      %p195 = por %p193, %p194
      %p197 = scmp.ne.s32.totalorder %s182, %s196
      %p198 = scmp.eq.s32.totalorder %s25, 0
      %p199 = por %p197, %p198
      %s200 = ssub.s32 %s19, %s26
      %p201 = scmp.eq.s32.totalorder %s200, 0
      %s203 = sadd.s32 %s202, 1
      %s204 = scalar_select %p201, %s202, %s203
      %p207 = pneg %p201
      %p208 = scmp.eq.s32.totalorder %s19, 1
      %p209 = por %p207, %p208
      %p210 = scmp.ne.s32.totalorder %s202, %s205
      %p211 = scmp.eq.s32.totalorder %s19, 0
      %p212 = por %p210, %p211
      %p213 = scmp.ne.s32.totalorder %s202, %s205
      %p214 = scmp.eq.s32.totalorder %s24, 1
      %p215 = por %p213, %p214
      %p216 = scmp.ne.s32.totalorder %s205, %s206
      %p217 = scmp.eq.s32.totalorder %s24, 0
      %p218 = por %p216, %p217
      %p219 = scmp.ne.s32.totalorder %s205, %s206
      %p220 = scmp.eq.s32.totalorder %s25, 1
      %p221 = por %p219, %p220
      %p223 = scmp.ne.s32.totalorder %s206, %s222
      %p224 = scmp.eq.s32.totalorder %s25, 0
      %p225 = por %p223, %p224
      %p226 = scmp.le.s32.totalorder 1, %s19
      %p227 = scmp.lt.s32.totalorder %s19, 3
      %p228 = pnand %p226, %p227
      %p229 = pneg %p228
      // Predicated region
      $region9: #{tpu_custom_call.1} parent=5 // pred_check
        _
      $region10: #{tpu_custom_call.1} parent=5 // pred_check_branch
        %231 = sbr.rel (%p228) target = $region12
      $region11: #{tpu_custom_call.1} parent=5 // pred_region
        %s232 = ssub.s32 %s19, 1
        // Predicated region
        $region13: #{tpu_custom_call.1} parent=11 // pred_check
          %p233 = pneg %p66
        $region14: #{tpu_custom_call.1} parent=11 // pred_check_branch
          %235 = sbr.rel (%p233) target = $region16
        $region15: #{tpu_custom_call.1} parent=11 // pred_region
          _
        $region16: #{tpu_custom_call.1} parent=11 // pred_fallthru
          _
        // Predicated region
        $region17: #{tpu_custom_call.1} parent=11 // pred_check
          %p236 = pneg %p87
        $region18: #{tpu_custom_call.1} parent=11 // pred_check_branch
          %238 = sbr.rel (%p236) target = $region20
        $region19: #{tpu_custom_call.1} parent=11 // pred_region
          _
        $region20: #{tpu_custom_call.1} parent=11 // pred_fallthru
          _
        // Predicated region
        $region21: #{tpu_custom_call.1} parent=11 // pred_check
          %p239 = pneg %p108
        $region22: #{tpu_custom_call.1} parent=11 // pred_check_branch
          %241 = sbr.rel (%p239) target = $region24
        $region23: #{tpu_custom_call.1} parent=11 // pred_region
          _
        $region24: #{tpu_custom_call.1} parent=11 // pred_fallthru
          _
        // Predicated region
        $region25: #{tpu_custom_call.1} parent=11 // pred_check
          %p242 = pneg %p129
        $region26: #{tpu_custom_call.1} parent=11 // pred_check_branch
          %244 = sbr.rel (%p242) target = $region28
        $region27: #{tpu_custom_call.1} parent=11 // pred_region
          %s246 = ssub.s32 256, 256
          %247 = vsyncadd [#allocation4], %s246
          %s248 = sshll.u32 [#allocation3], 4
          %s249 = int_to_ptr.vmem [resolvable:$true] %s248
          %254 = dma.hbm_to_vmem [thread:$0]  %s4, 256, %s249, [#allocation4], 64, 64, 4
        $region28: #{tpu_custom_call.1} parent=11 // pred_fallthru
          _
        // Predicated region
        $region29: #{tpu_custom_call.1} parent=11 // pred_check
          %p255 = pneg %p150
        $region30: #{tpu_custom_call.1} parent=11 // pred_check_branch
          %257 = sbr.rel (%p255) target = $region32
        $region31: #{tpu_custom_call.1} parent=11 // pred_region
          %s259 = ssub.s32 16, 16
          %260 = vsyncadd [#allocation7], %s259
          %s262 = sshll.u32 [#allocation6], 4
          %s263 = int_to_ptr.vmem [resolvable:$true] %s262
          %265 = dma.hbm_to_vmem [thread:$0]  %s5, 16, %s263, [#allocation7]
        $region32: #{tpu_custom_call.1} parent=11 // pred_fallthru
          _
        // Predicated region
        $region33: #{tpu_custom_call.1} parent=11 // pred_check
          %p266 = pneg %p171
        $region34: #{tpu_custom_call.1} parent=11 // pred_check_branch
          %268 = sbr.rel (%p266) target = $region36
        $region35: #{tpu_custom_call.1} parent=11 // pred_region
          _
        $region36: #{tpu_custom_call.1} parent=11 // pred_fallthru
          _
        // Predicated region
        $region37: #{tpu_custom_call.1} parent=11 // pred_check
          %p269 = pneg %p192
        $region38: #{tpu_custom_call.1} parent=11 // pred_check_branch
          %271 = sbr.rel (%p269) target = $region40
        $region39: #{tpu_custom_call.1} parent=11 // pred_region
          _
        $region40: #{tpu_custom_call.1} parent=11 // pred_fallthru
          _
      $region12: #{tpu_custom_call.1} parent=5 // pred_fallthru
        _
      %p272 = scmp.lt.s32.totalorder %s19, 2
      // Predicated region
      $region41: #{tpu_custom_call.1} parent=5 // pred_check
        %p273 = pneg %p272
      $region42: #{tpu_custom_call.1} parent=5 // pred_check_branch
        %275 = sbr.rel (%p273) target = $region44
      $region43: #{tpu_custom_call.1} parent=5 // pred_region
        // Predicated region
        $region45: #{tpu_custom_call.1} parent=43 // pred_check
          %p276 = pneg %p39
        $region46: #{tpu_custom_call.1} parent=43 // pred_check_branch
          %278 = sbr.rel (%p276) target = $region48
        $region47: #{tpu_custom_call.1} parent=43 // pred_region
          %p279 = scmp.lt.s32.totalorder %s19, 1
          %s280 = scalar_select %p279, %s19, 1
          %s281 = smul.addr %s280, 8
          %s282 = scalar_lea.vmem %s0, %s281
        $region48: #{tpu_custom_call.1} parent=43 // pred_fallthru
          _
      $region44: #{tpu_custom_call.1} parent=5 // pred_fallthru
        _
      %p283 = scmp.le.s32.totalorder 1, %s19
      %p284 = scmp.lt.s32.totalorder %s19, 3
      %p285 = pnand %p283, %p284
      %p286 = pneg %p285
      // Predicated region
      $region49: #{tpu_custom_call.1} parent=5 // pred_check
        _
      $region50: #{tpu_custom_call.1} parent=5 // pred_check_branch
        %288 = sbr.rel (%p285) target = $region52
      $region51: #{tpu_custom_call.1} parent=5 // pred_region
        %s289 = ssub.s32 %s19, 1
        // Predicated region
        $region53: #{tpu_custom_call.1} parent=51 // pred_check
          %p290 = pneg %p129
        $region54: #{tpu_custom_call.1} parent=51 // pred_check_branch
          %292 = sbr.rel (%p290) target = $region56
        $region55: #{tpu_custom_call.1} parent=51 // pred_region
          %293 = dma.done [#allocation4], 256
        $region56: #{tpu_custom_call.1} parent=51 // pred_fallthru
          _
        // Predicated region
        $region57: #{tpu_custom_call.1} parent=51 // pred_check
          %p294 = pneg %p150
        $region58: #{tpu_custom_call.1} parent=51 // pred_check_branch
          %296 = sbr.rel (%p294) target = $region60
        $region59: #{tpu_custom_call.1} parent=51 // pred_region
          %297 = dma.done [#allocation7], 16
        $region60: #{tpu_custom_call.1} parent=51 // pred_fallthru
          _
        %p298 = scmp.lt.s32.totalorder %s24, 1
        %s299 = scalar_select %p298, %s24, 1
        %s300 = smul.addr %s299, 8
        %s301 = scalar_lea.vmem %s0, %s300
        %p302 = pneg %p45
        %p303 = pneg %p42
        %p304 = pneg %p66
        %p305 = pneg %p63
        %p306 = pneg %p87
        %p307 = pneg %p84
        %p308 = pneg %p108
        %p309 = pneg %p105
        %p310 = pneg %p129
        %p311 = pneg %p126
        %p312 = pneg %p150
        %p313 = pneg %p147
        %p314 = pneg %p171
        %p315 = pneg %p168
        %p316 = pneg %p192
        %p317 = pneg %p189
        %p318 = pneg %p218
        %p319 = pneg %p215
        %s320 = sand.u32 %s205, 1
        %s321 = scalar_lea.sflag [#allocation5], %s320
        %s322 = sand.u32 %s205, 1
        %s323 = smul.addr %s322, 8
        %s324 = scalar_lea.vmem [#allocation8], %s323
        %p325 = scmp.lt.s32.totalorder %s24, 1
        %s326 = scalar_select %p325, %s24, 1
        %s327 = smul.addr %s326, 8
        %s328 = scalar_lea.vmem %s0, %s327
        %v330 = vld [vmem:[%s328] sm:$0xff]
        %v331 = vpack.c.bf16 %v330, %v330
        %v332 = vld [vmem:[%s1] sm:$0xf]
        %v333 = vld [vmem:[%s1 + $0x4] sm:$0xf]
        %v334 = vld [vmem:[%s1 + $0x8] sm:$0xf]
        %v335 = vld [vmem:[%s1 + $0xc] sm:$0xf]
        %v336 = vld [vmem:[%s2] sm:$0x1]
        %v338 = vlaneseq
        %v339 = vshrl.u32 %v338, 7
        %v340 = vsub.s32 0, %v339
        %v341 = vrot.slane %v336, %v340
        %v347 = vunpack.c.l.b16 %v332
        %v348 = vunpack.c.l.b16 %v333
        %v349 = vunpack.c.l.b16 %v334
        %v350 = vunpack.c.l.b16 %v335
        %v351 = vpack.c.b16 %v348, %v347
        %v352 = vpack.c.b16 %v350, %v349
        %vm355 = vcmask 261120
        %v357 = vsel %vm355, %v331, 0
        %359 = vmatprep.subr.bf16.mxu0 0
        %360 = vmatpush1.bf16.msra.mxu0 0
        %361 = vmatprep.subr.bf16.mxu0 0
        %362 = vmatpush1.bf16.msra.mxu0 0
        %363 = vmatprep.subr.bf16.mxu0 0
        %364 = vmatpush1.bf16.msra.mxu0 0
        %365 = vmatprep.subr.bf16.mxu0 0
        %366 = vmatpush1.bf16.msra.mxu0 0
        %367 = vmatprep.subr.bf16.mxu0 0
        %368 = vmatpush1.bf16.msra.mxu0 0
        %369 = vmatprep.subr.bf16.mxu0 0
        %370 = vmatpush1.bf16.msra.mxu0 0
        %371 = vmatprep.subr.bf16.mxu0 0
        %372 = vmatpush1.bf16.msra.mxu0 %v352
        %373 = vmatprep.subr.bf16.mxu0 0
        %374 = vmatpush1.bf16.msra.mxu0 %v351
        %375 = vmatprep.subr.bf16.mxu0 0
        %376 = vmatpush2.bf16.msra.mxu0 0
        %377 = vmatprep.subr.bf16.mxu0 0
        %378 = vmatpush2.bf16.msra.mxu0 0
        %379 = vmatprep.subr.bf16.mxu0 0
        %380 = vmatpush2.bf16.msra.mxu0 0
        %381 = vmatprep.subr.bf16.mxu0 0
        %382 = vmatpush2.bf16.msra.mxu0 0
        %383 = vmatprep.subr.bf16.mxu0 0
        %384 = vmatpush2.bf16.msra.mxu0 0
        %385 = vmatprep.subr.bf16.mxu0 0
        %386 = vmatpush2.bf16.msra.mxu0 0
        %387 = vmatprep.subr.bf16.mxu0 0
        %388 = vmatpush2.bf16.msra.mxu0 0
        %389 = vmatprep.subr.bf16.mxu0 0
        %390 = vmatpush2.bf16.msra.mxu0 0
        %391 = vmatprep.mubr.bf16.mxu0 0
        %392 = vmatmul.mubr.bf16.gmra.mxu0 %v357
        %v393 = vpop.f32.mrf.mxu0
        %v394 = vadd.f32 %v341, %v393
        %v395 = vpop.f32.mrf.mxu0
        %v396 = vpop.f32.mrf.mxu0
        %v397 = vpop.f32.mrf.mxu0
        %398 = vdwg.mxu0
        %v399 = vpack.c.bf16 %v394, %v394
        %401 = vrot.lane.b32.xlu0 %v399, 96
        %v402 = vpop.permute.xlu0 %401
        %vm403 = vcmask 64512
        %v405 = vsel %vm403, %v399, 0
        %v408 = vsel %vm403, %v402, 0
        %410 = vmatprep.subr.bf16.mxu0 0
        %411 = vmatpush1.bf16.xpose.msra.mxu0 0
        %412 = vmatprep.subr.bf16.mxu0 0
        %413 = vmatpush1.bf16.xpose.msra.mxu0 0
        %414 = vmatprep.subr.bf16.mxu0 0
        %415 = vmatpush1.bf16.xpose.msra.mxu0 0
        %416 = vmatprep.subr.bf16.mxu0 0
        %417 = vmatpush1.bf16.xpose.msra.mxu0 0
        %418 = vmatprep.subr.bf16.mxu0 0
        %419 = vmatpush1.bf16.xpose.msra.mxu0 0
        %420 = vmatprep.subr.bf16.mxu0 0
        %421 = vmatpush1.bf16.xpose.msra.mxu0 0
        %422 = vmatprep.subr.bf16.mxu0 0
        %423 = vmatpush1.bf16.xpose.msra.mxu0 0
        %424 = vmatprep.subr.bf16.mxu0 0
        %425 = vmatpush1.bf16.xpose.msra.mxu0 %v408
        %426 = vmatprep.subr.bf16.mxu0 0
        %427 = vmatpush2.bf16.xpose.msra.mxu0 0
        %428 = vmatprep.subr.bf16.mxu0 0
        %429 = vmatpush2.bf16.xpose.msra.mxu0 0
        %430 = vmatprep.subr.bf16.mxu0 0
        %431 = vmatpush2.bf16.xpose.msra.mxu0 0
        %432 = vmatprep.subr.bf16.mxu0 0
        %433 = vmatpush2.bf16.xpose.msra.mxu0 0
        %434 = vmatprep.subr.bf16.mxu0 0
        %435 = vmatpush2.bf16.xpose.msra.mxu0 0
        %436 = vmatprep.subr.bf16.mxu0 0
        %437 = vmatpush2.bf16.xpose.msra.mxu0 0
        %438 = vmatprep.subr.bf16.mxu0 0
        %439 = vmatpush2.bf16.xpose.msra.mxu0 0
        %440 = vmatprep.subr.bf16.mxu0 0
        %441 = vmatpush2.bf16.xpose.msra.mxu0 0
        %442 = vmatprep.mubr.bf16.mxu0 0
        %443 = vmatmul.mubr.bf16.gmra.mxu0 %v405
        %v444 = vpop.f32.mrf.mxu0
        %v445 = vadd.f32 0.0, %v444
        %v446 = vpop.f32.mrf.mxu0
        %v447 = vpop.f32.mrf.mxu0
        %v448 = vpop.f32.mrf.mxu0
        %449 = vdwg.mxu0
        %v450 = vsel %vm403, %v445, -inf
        %451 = vmax.xlane.f32.xlu0 %v450
        %v452 = vpop.xlane.xlu0 %451
        %v453 = vsub.f32 %v445, %v452
        %v454 = vmul.f32 %v453, 1.442695
        %v455 = vpow.pop %v454
        %v456 = vsel %vm403, %v455, 0.0
        %457 = vadd.xlane.f32.xlu0 %v456
        %v458 = vpop.xlane.xlu0 %457
        %v459 = vrcp.pop %v458
        %v460 = vmul.f32 %v455, %v459
        %v461 = vpack.c.bf16 %v460, %v460
        %462 = vrot.lane.b32.xlu0 %v399, 64
        %v463 = vpop.permute.xlu0 %462
        %v465 = vsel %vm403, %v461, 0
        %vm467 = vcmask 1043456
        %v469 = vsel %vm467, %v463, 0
        %471 = vmatprep.subr.bf16.mxu0 0
        %472 = vmatpush1.bf16.msra.mxu0 0
        %473 = vmatprep.subr.bf16.mxu0 0
        %474 = vmatpush1.bf16.msra.mxu0 0
        %475 = vmatprep.subr.bf16.mxu0 0
        %476 = vmatpush1.bf16.msra.mxu0 0
        %477 = vmatprep.subr.bf16.mxu0 0
        %478 = vmatpush1.bf16.msra.mxu0 0
        %479 = vmatprep.subr.bf16.mxu0 0
        %480 = vmatpush1.bf16.msra.mxu0 0
        %481 = vmatprep.subr.bf16.mxu0 0
        %482 = vmatpush1.bf16.msra.mxu0 0
        %483 = vmatprep.subr.bf16.mxu0 0
        %484 = vmatpush1.bf16.msra.mxu0 0
        %485 = vmatprep.subr.bf16.mxu0 0
        %486 = vmatpush1.bf16.msra.mxu0 %v469
        %487 = vmatprep.subr.bf16.mxu0 0
        %488 = vmatpush2.bf16.msra.mxu0 0
        %489 = vmatprep.subr.bf16.mxu0 0
        %490 = vmatpush2.bf16.msra.mxu0 0
        %491 = vmatprep.subr.bf16.mxu0 0
        %492 = vmatpush2.bf16.msra.mxu0 0
        %493 = vmatprep.subr.bf16.mxu0 0
        %494 = vmatpush2.bf16.msra.mxu0 0
        %495 = vmatprep.subr.bf16.mxu0 0
        %496 = vmatpush2.bf16.msra.mxu0 0
        %497 = vmatprep.subr.bf16.mxu0 0
        %498 = vmatpush2.bf16.msra.mxu0 0
        %499 = vmatprep.subr.bf16.mxu0 0
        %500 = vmatpush2.bf16.msra.mxu0 0
        %501 = vmatprep.subr.bf16.mxu0 0
        %502 = vmatpush2.bf16.msra.mxu0 0
        %503 = vmatprep.mubr.bf16.mxu0 0
        %504 = vmatmul.mubr.bf16.gmra.mxu0 %v465
        %v505 = vpop.f32.mrf.mxu0
        %v506 = vadd.f32 0.0, %v505
        %v507 = vpop.f32.mrf.mxu0
        %v508 = vpop.f32.mrf.mxu0
        %v509 = vpop.f32.mrf.mxu0
        %510 = vdwg.mxu0
        %511 = vst.msk [vmem:[#allocation2] sm:$0xff] %vm403, %v506
        %512 = vrot.lane.b32.xlu0 %v399, 120
        %v513 = vpop.permute.xlu0 %512
        %514 = vrot.lane.b32.xlu0 %v399, 88
        %v515 = vpop.permute.xlu0 %514
        %v517 = vsel %vm403, %v513, 0
        %v520 = vsel %vm403, %v515, 0
        %522 = vmatprep.subr.bf16.mxu0 0
        %523 = vmatpush1.bf16.xpose.msra.mxu0 0
        %524 = vmatprep.subr.bf16.mxu0 0
        %525 = vmatpush1.bf16.xpose.msra.mxu0 0
        %526 = vmatprep.subr.bf16.mxu0 0
        %527 = vmatpush1.bf16.xpose.msra.mxu0 0
        %528 = vmatprep.subr.bf16.mxu0 0
        %529 = vmatpush1.bf16.xpose.msra.mxu0 0
        %530 = vmatprep.subr.bf16.mxu0 0
        %531 = vmatpush1.bf16.xpose.msra.mxu0 0
        %532 = vmatprep.subr.bf16.mxu0 0
        %533 = vmatpush1.bf16.xpose.msra.mxu0 0
        %534 = vmatprep.subr.bf16.mxu0 0
        %535 = vmatpush1.bf16.xpose.msra.mxu0 0
        %536 = vmatprep.subr.bf16.mxu0 0
        %537 = vmatpush1.bf16.xpose.msra.mxu0 %v520
        %538 = vmatprep.subr.bf16.mxu0 0
        %539 = vmatpush2.bf16.xpose.msra.mxu0 0
        %540 = vmatprep.subr.bf16.mxu0 0
        %541 = vmatpush2.bf16.xpose.msra.mxu0 0
        %542 = vmatprep.subr.bf16.mxu0 0
        %543 = vmatpush2.bf16.xpose.msra.mxu0 0
        %544 = vmatprep.subr.bf16.mxu0 0
        %545 = vmatpush2.bf16.xpose.msra.mxu0 0
        %546 = vmatprep.subr.bf16.mxu0 0
        %547 = vmatpush2.bf16.xpose.msra.mxu0 0
        %548 = vmatprep.subr.bf16.mxu0 0
        %549 = vmatpush2.bf16.xpose.msra.mxu0 0
        %550 = vmatprep.subr.bf16.mxu0 0
        %551 = vmatpush2.bf16.xpose.msra.mxu0 0
        %552 = vmatprep.subr.bf16.mxu0 0
        %553 = vmatpush2.bf16.xpose.msra.mxu0 0
        %554 = vmatprep.mubr.bf16.mxu0 0
        %555 = vmatmul.mubr.bf16.gmra.mxu0 %v517
        %v556 = vpop.f32.mrf.mxu0
        %v557 = vadd.f32 0.0, %v556
        %v558 = vpop.f32.mrf.mxu0
        %v559 = vpop.f32.mrf.mxu0
        %v560 = vpop.f32.mrf.mxu0
        %561 = vdwg.mxu0
        %v562 = vsel %vm403, %v557, -inf
        %563 = vmax.xlane.f32.xlu0 %v562
        %v564 = vpop.xlane.xlu0 %563
        %v565 = vsub.f32 %v557, %v564
        %v566 = vmul.f32 %v565, 1.442695
        %v567 = vpow.pop %v566
        %v568 = vsel %vm403, %v567, 0.0
        %569 = vadd.xlane.f32.xlu0 %v568
        %v570 = vpop.xlane.xlu0 %569
        %v571 = vrcp.pop %v570
        %v572 = vmul.f32 %v567, %v571
        %v573 = vpack.c.bf16 %v572, %v572
        %574 = vrot.lane.b32.xlu0 %v399, 56
        %v575 = vpop.permute.xlu0 %574
        %v577 = vsel %vm403, %v573, 0
        %v580 = vsel %vm467, %v575, 0
        %582 = vmatprep.subr.bf16.mxu0 0
        %583 = vmatpush1.bf16.msra.mxu0 0
        %584 = vmatprep.subr.bf16.mxu0 0
        %585 = vmatpush1.bf16.msra.mxu0 0
        %586 = vmatprep.subr.bf16.mxu0 0
        %587 = vmatpush1.bf16.msra.mxu0 0
        %588 = vmatprep.subr.bf16.mxu0 0
        %589 = vmatpush1.bf16.msra.mxu0 0
        %590 = vmatprep.subr.bf16.mxu0 0
        %591 = vmatpush1.bf16.msra.mxu0 0
        %592 = vmatprep.subr.bf16.mxu0 0
        %593 = vmatpush1.bf16.msra.mxu0 0
        %594 = vmatprep.subr.bf16.mxu0 0
        %595 = vmatpush1.bf16.msra.mxu0 0
        %596 = vmatprep.subr.bf16.mxu0 0
        %597 = vmatpush1.bf16.msra.mxu0 %v580
        %598 = vmatprep.subr.bf16.mxu0 0
        %599 = vmatpush2.bf16.msra.mxu0 0
        %600 = vmatprep.subr.bf16.mxu0 0
        %601 = vmatpush2.bf16.msra.mxu0 0
        %602 = vmatprep.subr.bf16.mxu0 0
        %603 = vmatpush2.bf16.msra.mxu0 0
        %604 = vmatprep.subr.bf16.mxu0 0
        %605 = vmatpush2.bf16.msra.mxu0 0
        %606 = vmatprep.subr.bf16.mxu0 0
        %607 = vmatpush2.bf16.msra.mxu0 0
        %608 = vmatprep.subr.bf16.mxu0 0
        %609 = vmatpush2.bf16.msra.mxu0 0
        %610 = vmatprep.subr.bf16.mxu0 0
        %611 = vmatpush2.bf16.msra.mxu0 0
        %612 = vmatprep.subr.bf16.mxu0 0
        %613 = vmatpush2.bf16.msra.mxu0 0
        %614 = vmatprep.mubr.bf16.mxu0 0
        %615 = vmatmul.mubr.bf16.gmra.mxu0 %v577
        %v616 = vpop.f32.mrf.mxu0
        %v617 = vadd.f32 0.0, %v616
        %v618 = vpop.f32.mrf.mxu0
        %v619 = vpop.f32.mrf.mxu0
        %v620 = vpop.f32.mrf.mxu0
        %621 = vdwg.mxu0
        %623 = vrot.lane.b32.xlu0 %v617, 8
        %v624 = vpop.permute.xlu0 %623
        %vm626 = vcmask 130112
        %627 = vst.msk [vmem:[#allocation2] sm:$0xff] %vm626, %v624
        %628 = vrot.lane.b32.xlu0 %v399, 112
        %v629 = vpop.permute.xlu0 %628
        %630 = vrot.lane.b32.xlu0 %v399, 80
        %v631 = vpop.permute.xlu0 %630
        %v633 = vsel %vm403, %v629, 0
        %v636 = vsel %vm403, %v631, 0
        %638 = vmatprep.subr.bf16.mxu0 0
        %639 = vmatpush1.bf16.xpose.msra.mxu0 0
        %640 = vmatprep.subr.bf16.mxu0 0
        %641 = vmatpush1.bf16.xpose.msra.mxu0 0
        %642 = vmatprep.subr.bf16.mxu0 0
        %643 = vmatpush1.bf16.xpose.msra.mxu0 0
        %644 = vmatprep.subr.bf16.mxu0 0
        %645 = vmatpush1.bf16.xpose.msra.mxu0 0
        %646 = vmatprep.subr.bf16.mxu0 0
        %647 = vmatpush1.bf16.xpose.msra.mxu0 0
        %648 = vmatprep.subr.bf16.mxu0 0
        %649 = vmatpush1.bf16.xpose.msra.mxu0 0
        %650 = vmatprep.subr.bf16.mxu0 0
        %651 = vmatpush1.bf16.xpose.msra.mxu0 0
        %652 = vmatprep.subr.bf16.mxu0 0
        %653 = vmatpush1.bf16.xpose.msra.mxu0 %v636
        %654 = vmatprep.subr.bf16.mxu0 0
        %655 = vmatpush2.bf16.xpose.msra.mxu0 0
        %656 = vmatprep.subr.bf16.mxu0 0
        %657 = vmatpush2.bf16.xpose.msra.mxu0 0
        %658 = vmatprep.subr.bf16.mxu0 0
        %659 = vmatpush2.bf16.xpose.msra.mxu0 0
        %660 = vmatprep.subr.bf16.mxu0 0
        %661 = vmatpush2.bf16.xpose.msra.mxu0 0
        %662 = vmatprep.subr.bf16.mxu0 0
        %663 = vmatpush2.bf16.xpose.msra.mxu0 0
        %664 = vmatprep.subr.bf16.mxu0 0
        %665 = vmatpush2.bf16.xpose.msra.mxu0 0
        %666 = vmatprep.subr.bf16.mxu0 0
        %667 = vmatpush2.bf16.xpose.msra.mxu0 0
        %668 = vmatprep.subr.bf16.mxu0 0
        %669 = vmatpush2.bf16.xpose.msra.mxu0 0
        %670 = vmatprep.mubr.bf16.mxu0 0
        %671 = vmatmul.mubr.bf16.gmra.mxu0 %v633
        %v672 = vpop.f32.mrf.mxu0
        %v673 = vadd.f32 0.0, %v672
        %v674 = vpop.f32.mrf.mxu0
        %v675 = vpop.f32.mrf.mxu0
        %v676 = vpop.f32.mrf.mxu0
        %677 = vdwg.mxu0
        %v678 = vsel %vm403, %v673, -inf
        %679 = vmax.xlane.f32.xlu0 %v678
        %v680 = vpop.xlane.xlu0 %679
        %v681 = vsub.f32 %v673, %v680
        %v682 = vmul.f32 %v681, 1.442695
        %v683 = vpow.pop %v682
        %v684 = vsel %vm403, %v683, 0.0
        %685 = vadd.xlane.f32.xlu0 %v684
        %v686 = vpop.xlane.xlu0 %685
        %v687 = vrcp.pop %v686
        %v688 = vmul.f32 %v683, %v687
        %v689 = vpack.c.bf16 %v688, %v688
        %690 = vrot.lane.b32.xlu0 %v399, 48
        %v691 = vpop.permute.xlu0 %690
        %v693 = vsel %vm403, %v689, 0
        %v696 = vsel %vm467, %v691, 0
        %698 = vmatprep.subr.bf16.mxu0 0
        %699 = vmatpush1.bf16.msra.mxu0 0
        %700 = vmatprep.subr.bf16.mxu0 0
        %701 = vmatpush1.bf16.msra.mxu0 0
        %702 = vmatprep.subr.bf16.mxu0 0
        %703 = vmatpush1.bf16.msra.mxu0 0
        %704 = vmatprep.subr.bf16.mxu0 0
        %705 = vmatpush1.bf16.msra.mxu0 0
        %706 = vmatprep.subr.bf16.mxu0 0
        %707 = vmatpush1.bf16.msra.mxu0 0
        %708 = vmatprep.subr.bf16.mxu0 0
        %709 = vmatpush1.bf16.msra.mxu0 0
        %710 = vmatprep.subr.bf16.mxu0 0
        %711 = vmatpush1.bf16.msra.mxu0 0
        %712 = vmatprep.subr.bf16.mxu0 0
        %713 = vmatpush1.bf16.msra.mxu0 %v696
        %714 = vmatprep.subr.bf16.mxu0 0
        %715 = vmatpush2.bf16.msra.mxu0 0
        %716 = vmatprep.subr.bf16.mxu0 0
        %717 = vmatpush2.bf16.msra.mxu0 0
        %718 = vmatprep.subr.bf16.mxu0 0
        %719 = vmatpush2.bf16.msra.mxu0 0
        %720 = vmatprep.subr.bf16.mxu0 0
        %721 = vmatpush2.bf16.msra.mxu0 0
        %722 = vmatprep.subr.bf16.mxu0 0
        %723 = vmatpush2.bf16.msra.mxu0 0
        %724 = vmatprep.subr.bf16.mxu0 0
        %725 = vmatpush2.bf16.msra.mxu0 0
        %726 = vmatprep.subr.bf16.mxu0 0
        %727 = vmatpush2.bf16.msra.mxu0 0
        %728 = vmatprep.subr.bf16.mxu0 0
        %729 = vmatpush2.bf16.msra.mxu0 0
        %730 = vmatprep.mubr.bf16.mxu0 0
        %731 = vmatmul.mubr.bf16.gmra.mxu0 %v693
        %v732 = vpop.f32.mrf.mxu0
        %v733 = vadd.f32 0.0, %v732
        %v734 = vpop.f32.mrf.mxu0
        %v735 = vpop.f32.mrf.mxu0
        %v736 = vpop.f32.mrf.mxu0
        %737 = vdwg.mxu0
        %739 = vrot.lane.b32.xlu0 %v733, 16
        %v740 = vpop.permute.xlu0 %739
        %vm742 = vcmask 195712
        %743 = vst.msk [vmem:[#allocation2] sm:$0xff] %vm742, %v740
        %744 = vrot.lane.b32.xlu0 %v399, 104
        %v745 = vpop.permute.xlu0 %744
        %746 = vrot.lane.b32.xlu0 %v399, 72
        %v747 = vpop.permute.xlu0 %746
        %v749 = vsel %vm403, %v745, 0
        %v752 = vsel %vm403, %v747, 0
        %754 = vmatprep.subr.bf16.mxu0 0
        %755 = vmatpush1.bf16.xpose.msra.mxu0 0
        %756 = vmatprep.subr.bf16.mxu0 0
        %757 = vmatpush1.bf16.xpose.msra.mxu0 0
        %758 = vmatprep.subr.bf16.mxu0 0
        %759 = vmatpush1.bf16.xpose.msra.mxu0 0
        %760 = vmatprep.subr.bf16.mxu0 0
        %761 = vmatpush1.bf16.xpose.msra.mxu0 0
        %762 = vmatprep.subr.bf16.mxu0 0
        %763 = vmatpush1.bf16.xpose.msra.mxu0 0
        %764 = vmatprep.subr.bf16.mxu0 0
        %765 = vmatpush1.bf16.xpose.msra.mxu0 0
        %766 = vmatprep.subr.bf16.mxu0 0
        %767 = vmatpush1.bf16.xpose.msra.mxu0 0
        %768 = vmatprep.subr.bf16.mxu0 0
        %769 = vmatpush1.bf16.xpose.msra.mxu0 %v752
        %770 = vmatprep.subr.bf16.mxu0 0
        %771 = vmatpush2.bf16.xpose.msra.mxu0 0
        %772 = vmatprep.subr.bf16.mxu0 0
        %773 = vmatpush2.bf16.xpose.msra.mxu0 0
        %774 = vmatprep.subr.bf16.mxu0 0
        %775 = vmatpush2.bf16.xpose.msra.mxu0 0
        %776 = vmatprep.subr.bf16.mxu0 0
        %777 = vmatpush2.bf16.xpose.msra.mxu0 0
        %778 = vmatprep.subr.bf16.mxu0 0
        %779 = vmatpush2.bf16.xpose.msra.mxu0 0
        %780 = vmatprep.subr.bf16.mxu0 0
        %781 = vmatpush2.bf16.xpose.msra.mxu0 0
        %782 = vmatprep.subr.bf16.mxu0 0
        %783 = vmatpush2.bf16.xpose.msra.mxu0 0
        %784 = vmatprep.subr.bf16.mxu0 0
        %785 = vmatpush2.bf16.xpose.msra.mxu0 0
        %786 = vmatprep.mubr.bf16.mxu0 0
        %787 = vmatmul.mubr.bf16.gmra.mxu0 %v749
        %v788 = vpop.f32.mrf.mxu0
        %v789 = vadd.f32 0.0, %v788
        %v790 = vpop.f32.mrf.mxu0
        %v791 = vpop.f32.mrf.mxu0
        %v792 = vpop.f32.mrf.mxu0
        %793 = vdwg.mxu0
        %v794 = vsel %vm403, %v789, -inf
        %795 = vmax.xlane.f32.xlu0 %v794
        %v796 = vpop.xlane.xlu0 %795
        %v797 = vsub.f32 %v789, %v796
        %v798 = vmul.f32 %v797, 1.442695
        %v799 = vpow.pop %v798
        %v800 = vsel %vm403, %v799, 0.0
        %801 = vadd.xlane.f32.xlu0 %v800
        %v802 = vpop.xlane.xlu0 %801
        %v803 = vrcp.pop %v802
        %v804 = vmul.f32 %v799, %v803
        %v805 = vpack.c.bf16 %v804, %v804
        %806 = vrot.lane.b32.xlu0 %v399, 40
        %v807 = vpop.permute.xlu0 %806
        %v809 = vsel %vm403, %v805, 0
        %v812 = vsel %vm467, %v807, 0
        %814 = vmatprep.subr.bf16.mxu0 0
        %815 = vmatpush1.bf16.msra.mxu0 0
        %816 = vmatprep.subr.bf16.mxu0 0
        %817 = vmatpush1.bf16.msra.mxu0 0
        %818 = vmatprep.subr.bf16.mxu0 0
        %819 = vmatpush1.bf16.msra.mxu0 0
        %820 = vmatprep.subr.bf16.mxu0 0
        %821 = vmatpush1.bf16.msra.mxu0 0
        %822 = vmatprep.subr.bf16.mxu0 0
        %823 = vmatpush1.bf16.msra.mxu0 0
        %824 = vmatprep.subr.bf16.mxu0 0
        %825 = vmatpush1.bf16.msra.mxu0 0
        %826 = vmatprep.subr.bf16.mxu0 0
        %827 = vmatpush1.bf16.msra.mxu0 0
        %828 = vmatprep.subr.bf16.mxu0 0
        %829 = vmatpush1.bf16.msra.mxu0 %v812
        %830 = vmatprep.subr.bf16.mxu0 0
        %831 = vmatpush2.bf16.msra.mxu0 0
        %832 = vmatprep.subr.bf16.mxu0 0
        %833 = vmatpush2.bf16.msra.mxu0 0
        %834 = vmatprep.subr.bf16.mxu0 0
        %835 = vmatpush2.bf16.msra.mxu0 0
        %836 = vmatprep.subr.bf16.mxu0 0
        %837 = vmatpush2.bf16.msra.mxu0 0
        %838 = vmatprep.subr.bf16.mxu0 0
        %839 = vmatpush2.bf16.msra.mxu0 0
        %840 = vmatprep.subr.bf16.mxu0 0
        %841 = vmatpush2.bf16.msra.mxu0 0
        %842 = vmatprep.subr.bf16.mxu0 0
        %843 = vmatpush2.bf16.msra.mxu0 0
        %844 = vmatprep.subr.bf16.mxu0 0
        %845 = vmatpush2.bf16.msra.mxu0 0
        %846 = vmatprep.mubr.bf16.mxu0 0
        %847 = vmatmul.mubr.bf16.gmra.mxu0 %v809
        %v848 = vpop.f32.mrf.mxu0
        %v849 = vadd.f32 0.0, %v848
        %v850 = vpop.f32.mrf.mxu0
        %v851 = vpop.f32.mrf.mxu0
        %v852 = vpop.f32.mrf.mxu0
        %853 = vdwg.mxu0
        %855 = vrot.lane.b32.xlu0 %v849, 24
        %v856 = vpop.permute.xlu0 %855
        %vm858 = vcmask 261312
        %859 = vst.msk [vmem:[#allocation2] sm:$0xff] %vm858, %v856
        %v860 = vld [vmem:[#allocation2] sm:$0xff]
        %v861 = vpack.c.bf16 %v860, %v860
        %v862 = vld [vmem:[%s3] sm:$0xf]
        %v863 = vld [vmem:[%s3 + $0x4] sm:$0xf]
        %v864 = vld [vmem:[%s3 + $0x8] sm:$0xf]
        %v865 = vld [vmem:[%s3 + $0xc] sm:$0xf]
        %v866 = vld [vmem:[%s7] sm:$0x1]
        %v867 = vlaneseq
        %v868 = vshrl.u32 %v867, 7
        %v869 = vsub.s32 0, %v868
        %v870 = vrot.slane %v866, %v869
        %v875 = vunpack.c.l.b16 %v862
        %v876 = vunpack.c.l.b16 %v863
        %v877 = vunpack.c.l.b16 %v864
        %v878 = vunpack.c.l.b16 %v865
        %v879 = vpack.c.b16 %v876, %v875
        %v880 = vpack.c.b16 %v878, %v877
        %v884 = vsel %vm355, %v861, 0
        %886 = vmatprep.subr.bf16.mxu0 0
        %887 = vmatpush1.bf16.msra.mxu0 0
        %888 = vmatprep.subr.bf16.mxu0 0
        %889 = vmatpush1.bf16.msra.mxu0 0
        %890 = vmatprep.subr.bf16.mxu0 0
        %891 = vmatpush1.bf16.msra.mxu0 0
        %892 = vmatprep.subr.bf16.mxu0 0
        %893 = vmatpush1.bf16.msra.mxu0 0
        %894 = vmatprep.subr.bf16.mxu0 0
        %895 = vmatpush1.bf16.msra.mxu0 0
        %896 = vmatprep.subr.bf16.mxu0 0
        %897 = vmatpush1.bf16.msra.mxu0 0
        %898 = vmatprep.subr.bf16.mxu0 0
        %899 = vmatpush1.bf16.msra.mxu0 %v880
        %900 = vmatprep.subr.bf16.mxu0 0
        %901 = vmatpush1.bf16.msra.mxu0 %v879
        %902 = vmatprep.subr.bf16.mxu0 0
        %903 = vmatpush2.bf16.msra.mxu0 0
        %904 = vmatprep.subr.bf16.mxu0 0
        %905 = vmatpush2.bf16.msra.mxu0 0
        %906 = vmatprep.subr.bf16.mxu0 0
        %907 = vmatpush2.bf16.msra.mxu0 0
        %908 = vmatprep.subr.bf16.mxu0 0
        %909 = vmatpush2.bf16.msra.mxu0 0
        %910 = vmatprep.subr.bf16.mxu0 0
        %911 = vmatpush2.bf16.msra.mxu0 0
        %912 = vmatprep.subr.bf16.mxu0 0
        %913 = vmatpush2.bf16.msra.mxu0 0
        %914 = vmatprep.subr.bf16.mxu0 0
        %915 = vmatpush2.bf16.msra.mxu0 0
        %916 = vmatprep.subr.bf16.mxu0 0
        %917 = vmatpush2.bf16.msra.mxu0 0
        %918 = vmatprep.mubr.bf16.mxu0 0
        %919 = vmatmul.mubr.bf16.gmra.mxu0 %v884
        %v920 = vpop.f32.mrf.mxu0
        %v921 = vadd.f32 %v870, %v920
        %v922 = vpop.f32.mrf.mxu0
        %v923 = vpop.f32.mrf.mxu0
        %v924 = vpop.f32.mrf.mxu0
        %925 = vdwg.mxu0
        %v926 = vadd.f32 %v330, %v921
        %v927 = vld [vmem:[%s7 + $0x1] sm:$0x1]
        %v928 = vld [vmem:[%s7 + $0x2] sm:$0x1]
        %v929 = vsel %vm355, %v926, 0.0
        %930 = vadd.xlane.f32.xlu0 %v929
        %v931 = vpop.xlane.xlu0 %930
        %v932 = vrcp.pop 32.0
        %v933 = vmul.f32 %v931, %v932
        %v934 = vsub.f32 %v926, %v933
        %v935 = vmul.f32 %v934, %v934
        %v936 = vsel %vm355, %v935, 0.0
        %937 = vadd.xlane.f32.xlu0 %v936
        %v938 = vpop.xlane.xlu0 %937
        %v939 = vmul.f32 %v938, %v932
        %v940 = vadd.f32 %v939, 1e-06
        %v941 = vrsqrt.pop %v940
        %v942 = vmul.f32 %v934, %v941
        %v943 = vlaneseq
        %v944 = vshrl.u32 %v943, 7
        %v945 = vsub.s32 0, %v944
        %v946 = vrot.slane %v927, %v945
        %v947 = vmul.f32 %v942, %v946
        %v948 = vlaneseq
        %v949 = vshrl.u32 %v948, 7
        %v950 = vsub.s32 0, %v949
        %v951 = vrot.slane %v928, %v950
        %v952 = vadd.f32 %v947, %v951
        %v953 = vpack.c.bf16 %v952, %v952
        %v954 = vld [vmem:[#allocation3] sm:$0xf]
        %v955 = vld [vmem:[#allocation3 + $0x4] sm:$0xf]
        %v956 = vld [vmem:[#allocation3 + $0x8] sm:$0xf]
        %v957 = vld [vmem:[#allocation3 + $0xc] sm:$0xf]
        %v958 = vld [vmem:[#allocation6] sm:$0x1]
        %v960 = vlaneseq
        %v961 = vshrl.u32 %v960, 7
        %v962 = vsub.s32 0, %v961
        %v963 = vrot.slane %v958, %v962
        %v969 = vunpack.c.l.b16 %v954
        %v970 = vunpack.c.l.b16 %v955
        %v971 = vunpack.c.l.b16 %v956
        %v972 = vunpack.c.l.b16 %v957
        %v973 = vpack.c.b16 %v970, %v969
        %v974 = vpack.c.b16 %v972, %v971
        %v978 = vsel %vm355, %v953, 0
        %980 = vmatprep.subr.bf16.mxu0 0
        %981 = vmatpush1.bf16.msra.mxu0 0
        %982 = vmatprep.subr.bf16.mxu0 0
        %983 = vmatpush1.bf16.msra.mxu0 0
        %984 = vmatprep.subr.bf16.mxu0 0
        %985 = vmatpush1.bf16.msra.mxu0 0
        %986 = vmatprep.subr.bf16.mxu0 0
        %987 = vmatpush1.bf16.msra.mxu0 0
        %988 = vmatprep.subr.bf16.mxu0 0
        %989 = vmatpush1.bf16.msra.mxu0 0
        %990 = vmatprep.subr.bf16.mxu0 0
        %991 = vmatpush1.bf16.msra.mxu0 0
        %992 = vmatprep.subr.bf16.mxu0 0
        %993 = vmatpush1.bf16.msra.mxu0 %v974
        %994 = vmatprep.subr.bf16.mxu0 0
        %995 = vmatpush1.bf16.msra.mxu0 %v973
        %996 = vmatprep.subr.bf16.mxu0 0
        %997 = vmatpush2.bf16.msra.mxu0 0
        %998 = vmatprep.subr.bf16.mxu0 0
        %999 = vmatpush2.bf16.msra.mxu0 0
        %1000 = vmatprep.subr.bf16.mxu0 0
        %1001 = vmatpush2.bf16.msra.mxu0 0
        %1002 = vmatprep.subr.bf16.mxu0 0
        %1003 = vmatpush2.bf16.msra.mxu0 0
        %1004 = vmatprep.subr.bf16.mxu0 0
        %1005 = vmatpush2.bf16.msra.mxu0 0
        %1006 = vmatprep.subr.bf16.mxu0 0
        %1007 = vmatpush2.bf16.msra.mxu0 0
        %1008 = vmatprep.subr.bf16.mxu0 0
        %1009 = vmatpush2.bf16.msra.mxu0 0
        %1010 = vmatprep.subr.bf16.mxu0 0
        %1011 = vmatpush2.bf16.msra.mxu0 0
        %1012 = vmatprep.mubr.bf16.mxu0 0
        %1013 = vmatmul.mubr.bf16.gmra.mxu0 %v978
        %v1014 = vpop.f32.mrf.mxu0
        %v1015 = vadd.f32 %v963, %v1014
        %v1016 = vpop.f32.mrf.mxu0
        %v1017 = vpop.f32.mrf.mxu0
        %v1018 = vpop.f32.mrf.mxu0
        %1019 = vdwg.mxu0
        %v1020 = vmax.f32 %v1015, 0.0
        %v1021 = vpack.c.bf16 %v1020, %v1020
        %v1022 = vld [vmem:[%s6] sm:$0xf]
        %v1023 = vld [vmem:[%s6 + $0x4] sm:$0xf]
        %v1024 = vld [vmem:[%s6 + $0x8] sm:$0xf]
        %v1025 = vld [vmem:[%s6 + $0xc] sm:$0xf]
        %v1026 = vld [vmem:[%s6 + $0x10] sm:$0xf]
        %v1027 = vld [vmem:[%s6 + $0x14] sm:$0xf]
        %v1028 = vld [vmem:[%s6 + $0x18] sm:$0xf]
        %v1029 = vld [vmem:[%s6 + $0x1c] sm:$0xf]
        %v1030 = vld [vmem:[%s7 + $0x3] sm:$0x1]
        %v1031 = vlaneseq
        %v1032 = vshrl.u32 %v1031, 7
        %v1033 = vsub.s32 0, %v1032
        %v1034 = vrot.slane %v1030, %v1033
        %v1043 = vunpack.c.l.b16 %v1022
        %v1044 = vunpack.c.l.b16 %v1023
        %v1045 = vunpack.c.l.b16 %v1024
        %v1046 = vunpack.c.l.b16 %v1025
        %v1047 = vunpack.c.l.b16 %v1026
        %v1048 = vunpack.c.l.b16 %v1027
        %v1049 = vunpack.c.l.b16 %v1028
        %v1050 = vunpack.c.l.b16 %v1029
        %v1051 = vpack.c.b16 %v1044, %v1043
        %v1052 = vpack.c.b16 %v1046, %v1045
        %v1053 = vpack.c.b16 %v1048, %v1047
        %v1054 = vpack.c.b16 %v1050, %v1049
        %vm1059 = vcmask 523264
        %v1061 = vsel %vm1059, %v1021, 0
        %1063 = vmatprep.subr.bf16.mxu0 0
        %1064 = vmatpush1.bf16.msra.mxu0 0
        %1065 = vmatprep.subr.bf16.mxu0 0
        %1066 = vmatpush1.bf16.msra.mxu0 0
        %1067 = vmatprep.subr.bf16.mxu0 0
        %1068 = vmatpush1.bf16.msra.mxu0 0
        %1069 = vmatprep.subr.bf16.mxu0 0
        %1070 = vmatpush1.bf16.msra.mxu0 0
        %1071 = vmatprep.subr.bf16.mxu0 0
        %1072 = vmatpush1.bf16.msra.mxu0 %v1054
        %1073 = vmatprep.subr.bf16.mxu0 0
        %1074 = vmatpush1.bf16.msra.mxu0 %v1053
        %1075 = vmatprep.subr.bf16.mxu0 0
        %1076 = vmatpush1.bf16.msra.mxu0 %v1052
        %1077 = vmatprep.subr.bf16.mxu0 0
        %1078 = vmatpush1.bf16.msra.mxu0 %v1051
        %1079 = vmatprep.subr.bf16.mxu0 0
        %1080 = vmatpush2.bf16.msra.mxu0 0
        %1081 = vmatprep.subr.bf16.mxu0 0
        %1082 = vmatpush2.bf16.msra.mxu0 0
        %1083 = vmatprep.subr.bf16.mxu0 0
        %1084 = vmatpush2.bf16.msra.mxu0 0
        %1085 = vmatprep.subr.bf16.mxu0 0
        %1086 = vmatpush2.bf16.msra.mxu0 0
        %1087 = vmatprep.subr.bf16.mxu0 0
        %1088 = vmatpush2.bf16.msra.mxu0 0
        %1089 = vmatprep.subr.bf16.mxu0 0
        %1090 = vmatpush2.bf16.msra.mxu0 0
        %1091 = vmatprep.subr.bf16.mxu0 0
        %1092 = vmatpush2.bf16.msra.mxu0 0
        %1093 = vmatprep.subr.bf16.mxu0 0
        %1094 = vmatpush2.bf16.msra.mxu0 0
        %1095 = vmatprep.mubr.bf16.mxu0 0
        %1096 = vmatmul.mubr.bf16.gmra.mxu0 %v1061
        %v1097 = vpop.f32.mrf.mxu0
        %v1098 = vadd.f32 %v1034, %v1097
        %v1099 = vpop.f32.mrf.mxu0
        %v1100 = vpop.f32.mrf.mxu0
        %v1101 = vpop.f32.mrf.mxu0
        %1102 = vdwg.mxu0
        %v1103 = vadd.f32 %v952, %v1098
        %v1104 = vld [vmem:[%s7 + $0x4] sm:$0x1]
        %v1105 = vld [vmem:[%s7 + $0x5] sm:$0x1]
        %v1106 = vsel %vm355, %v1103, 0.0
        %1107 = vadd.xlane.f32.xlu0 %v1106
        %v1108 = vpop.xlane.xlu0 %1107
        %v1109 = vmul.f32 %v1108, %v932
        %v1110 = vsub.f32 %v1103, %v1109
        %v1111 = vmul.f32 %v1110, %v1110
        %v1112 = vsel %vm355, %v1111, 0.0
        %1113 = vadd.xlane.f32.xlu0 %v1112
        %v1114 = vpop.xlane.xlu0 %1113
        %v1115 = vmul.f32 %v1114, %v932
        %v1116 = vadd.f32 %v1115, 1e-06
        %v1117 = vrsqrt.pop %v1116
        %v1118 = vmul.f32 %v1110, %v1117
        %v1119 = vlaneseq
        %v1120 = vshrl.u32 %v1119, 7
        %v1121 = vsub.s32 0, %v1120
        %v1122 = vrot.slane %v1104, %v1121
        %v1123 = vmul.f32 %v1118, %v1122
        %v1124 = vlaneseq
        %v1125 = vshrl.u32 %v1124, 7
        %v1126 = vsub.s32 0, %v1125
        %v1127 = vrot.slane %v1105, %v1126
        %v1128 = vadd.f32 %v1123, %v1127
        %1129 = vst.msk [vmem:[%s324] sm:$0xff] %vm355, %v1128
        %s1130 = sand.u32 %s205, 1
        %s1131 = scalar_lea.sflag [#allocation5], %s1130
        %s1132 = sand.u32 %s205, 1
        %s1133 = smul.addr %s1132, 8
        %s1134 = scalar_lea.vmem [#allocation8], %s1133
        // Predicated region
        $region61: #{tpu_custom_call.1} parent=51 // pred_check
          %p1135 = pneg %p215
        $region62: #{tpu_custom_call.1} parent=51 // pred_check_branch
          %1137 = sbr.rel (%p1135) target = $region64
        $region63: #{tpu_custom_call.1} parent=51 // pred_region
          %s1139 = ssub.s32 128, 128
          %1140 = vsyncadd %s1131, %s1139
          %s1141 = smul.addr %s24, 128
          %s1142 = scalar_lea.hbm %s8, %s1141
          %s1144 = sshll.u32 %s1134, 4
          %s1145 = int_to_ptr.vmem [resolvable:$true] %s1144
          %1147 = dma.vmem_to_hbm [thread:$0]  %s1145, 128, %s1142, %s1131
        $region64: #{tpu_custom_call.1} parent=51 // pred_fallthru
          _
      $region52: #{tpu_custom_call.1} parent=5 // pred_fallthru
        _
      %p1148 = scmp.le.s32.totalorder 2, %s19
      // Predicated region
      $region65: #{tpu_custom_call.1} parent=5 // pred_check
        %p1149 = pneg %p1148
      $region66: #{tpu_custom_call.1} parent=5 // pred_check_branch
        %1151 = sbr.rel (%p1149) target = $region68
      $region67: #{tpu_custom_call.1} parent=5 // pred_region
        %s1152 = ssub.s32 %s19, 2
        // Predicated region
        $region69: #{tpu_custom_call.1} parent=67 // pred_check
          %p1153 = pneg %p221
        $region70: #{tpu_custom_call.1} parent=67 // pred_check_branch
          %1155 = sbr.rel (%p1153) target = $region72
        $region71: #{tpu_custom_call.1} parent=67 // pred_region
          %s1156 = sand.u32 %s206, 1
          %s1157 = scalar_lea.sflag [#allocation5], %s1156
          %s1158 = sand.u32 %s206, 1
          %s1159 = smul.addr %s1158, 8
          %s1160 = scalar_lea.vmem [#allocation8], %s1159
          %1161 = dma.done %s1157, 128
        $region72: #{tpu_custom_call.1} parent=67 // pred_fallthru
          _
      $region68: #{tpu_custom_call.1} parent=5 // pred_fallthru
        _
    $region6: #{tpu_custom_call.1} parent=1 // loop_footer
      %s23 = sadd.s32 1, %s19
    $region7: #{tpu_custom_call.1} parent=1 // loop_footer_branch
      %18 = sbr.rel target = $region3
    $region8: #{tpu_custom_call.1} parent=1 // loop_exit
      _
    %1162 = vsyncpa [#allocation4], 1
    %s1163 = scalar_lea.sflag [#allocation4], 1
    %1164 = vsyncpa %s1163, 1
    %1165 = vsyncpa [#allocation7], 1
    %1166 = vsyncpa [#allocation5], 1
    %s1167 = scalar_lea.sflag [#allocation5], 1
    %1168 = vsyncpa %s1167, 1

</llo_original>
